<compile_context>
chip_gen: v6e
topology: v6e:2x2x1
jax: 0.10.0
libtpu: 0.0.40
codegen_flags: <defaults>
</compile_context>

<pallas_src>
import functools
import math

import jax
import jax.numpy as jnp
import numpy as np
from jax.experimental import pallas as pl
from jax.experimental.pallas import tpu as pltpu

HIGHEST = jax.lax.Precision.HIGHEST


def _mha_kernel(q_ref, k_ref, v_ref, mask_ref,
                wq_ref, bq_ref, wk_ref, bk_ref, wv_ref, bv_ref, wo_ref, bo_ref,
                out_ref, *, num_heads: int, d_k: int):
    # One batch element per grid step; activation refs are (1, S, D) bf16.
    xq = q_ref[0]                                   # (S, D)
    xk = k_ref[0]
    xv = v_ref[0]

    # Input projections: bf16 MXU matmuls, f32 accumulation, f32 bias add.
    # (w*_ref already hold W^T, i.e. (D_in, D_out), in bf16.)
    Q = jnp.dot(xq, wq_ref[...], preferred_element_type=jnp.float32) + bq_ref[...]
    K = jnp.dot(xk, wk_ref[...], preferred_element_type=jnp.float32) + bk_ref[...]
    V = jnp.dot(xv, wv_ref[...], preferred_element_type=jnp.float32) + bv_ref[...]

    # Fold the 1/sqrt(d_k) score scale into Q (S*D mults instead of H*S*S).
    Q = Q * jnp.float32(1.0 / math.sqrt(d_k))

    # Split heads: (S, D) -> (H, S, d_k), bf16 operands for the MXU.
    def split_heads(x):
        xb = x.astype(jnp.bfloat16)
        return jnp.stack(
            [xb[:, h * d_k:(h + 1) * d_k] for h in range(num_heads)], axis=0)

    Qh = split_heads(Q)                             # (H, S, d_k)
    Kh = split_heads(K)
    Vh = split_heads(V)

    # Head-batched attention scores: one MXU call covers all heads.
    scores = jnp.einsum("hqd,hkd->hqk", Qh, Kh,
                        preferred_element_type=jnp.float32)   # (H, S, S) f32

    # Mask predicate computed once, broadcast over heads (masked_fill(-1e9)).
    neg = mask_ref[...] == 0                                   # (S, S)
    scores = jnp.where(neg[None, :, :], jnp.float32(-1.0e9), scores)

    # Numerically-stable softmax; normalize AFTER the PV matmul.
    m = jnp.max(scores, axis=-1, keepdims=True)                # (H, S, 1)
    p = jnp.exp(scores - m)                                    # (H, S, S)
    denom = jnp.sum(p, axis=-1, keepdims=True)                 # (H, S, 1)

    o = jnp.einsum("hqk,hkd->hqd", p.astype(jnp.bfloat16), Vh,
                   preferred_element_type=jnp.float32)         # (H, S, d_k)
    o = o * pl.reciprocal(denom, approx=True)                  # EUP reciprocal

    # Merge heads back to (S, D) and apply the output projection.
    o_cat = jnp.concatenate([o[h] for h in range(num_heads)], axis=-1)  # (S, D)
    y = jnp.dot(o_cat.astype(jnp.bfloat16), wo_ref[...],
                preferred_element_type=jnp.float32) + bo_ref[...]
    out_ref[0] = y.astype(out_ref.dtype)


def mha_forward(k, q, v, mask, params, *, num_heads: int):
    """Pallas implementation of MultiHeadAttentionBlock.forward (dropout=None)."""
    B, S, D = q.shape
    assert D % num_heads == 0
    d_k = D // num_heads
    cdt = jnp.bfloat16

    # nn.Linear: y = x @ W^T + b.  Pre-transpose weights once (host side), cast
    # weights/activations to bf16 (MXU-native); biases stay f32 (post-accum add).
    wq_t = params["w_q"]["weight"].T.astype(cdt)
    wk_t = params["w_k"]["weight"].T.astype(cdt)
    wv_t = params["w_v"]["weight"].T.astype(cdt)
    wo_t = params["w_o"]["weight"].T.astype(cdt)
    bq = params["w_q"]["bias"].reshape(1, D).astype(jnp.float32)
    bk = params["w_k"]["bias"].reshape(1, D).astype(jnp.float32)
    bv = params["w_v"]["bias"].reshape(1, D).astype(jnp.float32)
    bo = params["w_o"]["bias"].reshape(1, D).astype(jnp.float32)

    per_batch = pl.BlockSpec((1, S, D), lambda b: (b, 0, 0))
    full_mat = pl.BlockSpec((D, D), lambda b: (0, 0))
    full_bias = pl.BlockSpec((1, D), lambda b: (0, 0))
    full_mask = pl.BlockSpec((S, S), lambda b: (0, 0))

    kernel = functools.partial(_mha_kernel, num_heads=num_heads, d_k=d_k)

    # Advisory cost estimate for XLA scheduling around the custom call.
    flops = B * (8 * S * D * D + 4 * S * S * D)
    transcendentals = B * num_heads * S * (S + 1)          # exp + reciprocal
    bytes_accessed = (B * S * D * (3 * 2 + 4)              # q/k/v bf16 + out f32
                      + 4 * D * D * 2                      # 4 bf16 weights
                      + 4 * D * 4                          # 4 f32 biases
                      + S * S * 4)                         # f32 mask

    return pl.pallas_call(
        kernel,
        out_shape=jax.ShapeDtypeStruct((B, S, D), q.dtype),
        grid=(B,),
        in_specs=[per_batch, per_batch, per_batch, full_mask,
                  full_mat, full_bias, full_mat, full_bias,
                  full_mat, full_bias, full_mat, full_bias],
        out_specs=per_batch,
        compiler_params=pltpu.CompilerParams(
            dimension_semantics=("parallel",),
            vmem_limit_bytes=64 * 1024 * 1024),
        cost_estimate=pl.CostEstimate(flops=flops,
                                      transcendentals=transcendentals,
                                      bytes_accessed=bytes_accessed),
    )(q.astype(cdt), k.astype(cdt), v.astype(cdt), mask.astype(jnp.float32),
      wq_t, bq, wk_t, bk, wv_t, bv, wo_t, bo)


def mha_reference(k, q, v, mask, params, *, num_heads: int):
    """Pure-JAX f32 reference mirroring the (intended) PyTorch semantics."""
    B, S, D = q.shape
    d_k = D // num_heads

    def lin(x, p):
        return jnp.einsum("bsd,od->bso", x, p["weight"],
                          precision=HIGHEST) + p["bias"]

    K = lin(k, params["w_k"]).reshape(B, S, num_heads, d_k).transpose(0, 2, 1, 3)
    Q = lin(q, params["w_q"]).reshape(B, S, num_heads, d_k).transpose(0, 2, 1, 3)
    V = lin(v, params["w_v"]).reshape(B, S, num_heads, d_k).transpose(0, 2, 1, 3)

    scores = jnp.einsum("bhqd,bhkd->bhqk", Q, K, precision=HIGHEST) / math.sqrt(d_k)
    scores = jnp.where(mask[None, None] == 0, -1.0e9, scores)
    attn = jax.nn.softmax(scores, axis=-1)
    out = jnp.einsum("bhqk,bhkd->bhqd", attn, V, precision=HIGHEST)
    out = out.transpose(0, 2, 1, 3).reshape(B, S, D)
    return lin(out, params["w_o"])


def init_linear(key, d_in, d_out):
    """Deterministic init mimicking nn.Linear default (uniform +/- 1/sqrt(d_in))."""
    kw, kb = jax.random.split(key)
    bound = 1.0 / math.sqrt(d_in)
    weight = jax.random.uniform(kw, (d_out, d_in), jnp.float32, -bound, bound)
    bias = jax.random.uniform(kb, (d_out,), jnp.float32, -bound, bound)
    return {"weight": weight, "bias": bias}


if __name__ == "__main__":
    # Small but lane-dense shapes: D = 128 (full lane width), S multiple of 8.
    B, S, D, H = 2, 64, 128, 4   # d_k = 32

    root = jax.random.PRNGKey(0)
    kk, kq, kv, kwq, kwk, kwv, kwo = jax.random.split(root, 7)

    k_in = jax.random.normal(kk, (B, S, D), jnp.float32)
    q_in = jax.random.normal(kq, (B, S, D), jnp.float32)
    v_in = jax.random.normal(kv, (B, S, D), jnp.float32)

    params = {
        "w_q": init_linear(kwq, D, D),
        "w_k": init_linear(kwk, D, D),
        "w_v": init_linear(kwv, D, D),
        "w_o": init_linear(kwo, D, D),
    }

    # causal mask (S, S): 1 = keep, 0 = masked out (filled with -1e9 before softmax)
    mask = jnp.tril(jnp.ones((S, S), jnp.float32))

    out = mha_forward(k_in, q_in, v_in, mask, params, num_heads=H)
    out = jax.block_until_ready(out)

    ref = mha_reference(k_in, q_in, v_in, mask, params, num_heads=H)
    # Tolerance accounts for bf16 MXU inputs + approximate (EUP) reciprocal in
    # the kernel vs. the f32 HIGHEST reference.
    np.testing.assert_allclose(np.asarray(out), np.asarray(ref),
                               rtol=5e-2, atol=5e-2)

    print("KERNEL_OK")
</pallas_src>

<mosaic_0001>
module attributes {stable_mosaic.version = 11 : i64} {
  func.func @_mha_kernel(%arg0: i32, %arg1: memref<1x64x128xbf16, #tpu.memory_space<vmem>>, %arg2: memref<1x64x128xbf16, #tpu.memory_space<vmem>>, %arg3: memref<1x64x128xbf16, #tpu.memory_space<vmem>>, %arg4: memref<64x64xf32, #tpu.memory_space<vmem>>, %arg5: memref<128x128xbf16, #tpu.memory_space<vmem>>, %arg6: memref<1x128xf32, #tpu.memory_space<vmem>>, %arg7: memref<128x128xbf16, #tpu.memory_space<vmem>>, %arg8: memref<1x128xf32, #tpu.memory_space<vmem>>, %arg9: memref<128x128xbf16, #tpu.memory_space<vmem>>, %arg10: memref<1x128xf32, #tpu.memory_space<vmem>>, %arg11: memref<128x128xbf16, #tpu.memory_space<vmem>>, %arg12: memref<1x128xf32, #tpu.memory_space<vmem>>, %arg13: memref<1x64x128xf32, #tpu.memory_space<vmem>>) attributes {dimension_semantics = [#tpu.dimension_semantics<parallel>], iteration_bounds = array<i64: 2>, scalar_prefetch = 0 : i64, scratch_operands = 0 : i64, tpu.core_type = #tpu.core_type<tc>, window_params = [{transform_indices = @transform_0, window_bounds = array<i64: 1, 64, 128>}, {transform_indices = @transform_1, window_bounds = array<i64: 1, 64, 128>}, {transform_indices = @transform_2, window_bounds = array<i64: 1, 64, 128>}, {pipeline_mode = #tpu.pipeline_mode<synchronous>, transform_indices = @transform_3, window_bounds = array<i64: 64, 64>}, {pipeline_mode = #tpu.pipeline_mode<synchronous>, transform_indices = @transform_4, window_bounds = array<i64: 128, 128>}, {pipeline_mode = #tpu.pipeline_mode<synchronous>, transform_indices = @transform_5, window_bounds = array<i64: 1, 128>}, {pipeline_mode = #tpu.pipeline_mode<synchronous>, transform_indices = @transform_6, window_bounds = array<i64: 128, 128>}, {pipeline_mode = #tpu.pipeline_mode<synchronous>, transform_indices = @transform_7, window_bounds = array<i64: 1, 128>}, {pipeline_mode = #tpu.pipeline_mode<synchronous>, transform_indices = @transform_8, window_bounds = array<i64: 128, 128>}, {pipeline_mode = #tpu.pipeline_mode<synchronous>, transform_indices = @transform_9, window_bounds = array<i64: 1, 128>}, {pipeline_mode = #tpu.pipeline_mode<synchronous>, transform_indices = @transform_10, window_bounds = array<i64: 128, 128>}, {pipeline_mode = #tpu.pipeline_mode<synchronous>, transform_indices = @transform_11, window_bounds = array<i64: 1, 128>}, {transform_indices = @transform_12, window_bounds = array<i64: 1, 64, 128>}]} {
    %c0 = arith.constant 0 : index
    %c0_0 = arith.constant 0 : index
    %c0_1 = arith.constant 0 : index
    %0 = vector.load %arg1[%c0, %c0_0, %c0_1] : memref<1x64x128xbf16, #tpu.memory_space<vmem>>, vector<1x64x128xbf16>
    %1 = vector.shape_cast %0 : vector<1x64x128xbf16> to vector<64x128xbf16>
    %c0_2 = arith.constant 0 : index
    %c0_3 = arith.constant 0 : index
    %c0_4 = arith.constant 0 : index
    %2 = vector.load %arg2[%c0_2, %c0_3, %c0_4] : memref<1x64x128xbf16, #tpu.memory_space<vmem>>, vector<1x64x128xbf16>
    %3 = vector.shape_cast %2 : vector<1x64x128xbf16> to vector<64x128xbf16>
    %c0_5 = arith.constant 0 : index
    %c0_6 = arith.constant 0 : index
    %c0_7 = arith.constant 0 : index
    %4 = vector.load %arg3[%c0_5, %c0_6, %c0_7] : memref<1x64x128xbf16, #tpu.memory_space<vmem>>, vector<1x64x128xbf16>
    %5 = vector.shape_cast %4 : vector<1x64x128xbf16> to vector<64x128xbf16>
    %c0_8 = arith.constant 0 : index
    %c0_9 = arith.constant 0 : index
    %6 = vector.load %arg5[%c0_8, %c0_9] : memref<128x128xbf16, #tpu.memory_space<vmem>>, vector<128x128xbf16>
    %cst = arith.constant dense<0.000000e+00> : vector<64x128xf32>
    %7 = tpu.matmul %1, %6, %cst {dimension_numbers = #tpu.dot_dimension_numbers<[1], [0], [0], [1], [0, 0, 1, 1], [], []>} : vector<64x128xbf16>, vector<128x128xbf16>, vector<64x128xf32> -> vector<64x128xf32>
    %c0_10 = arith.constant 0 : index
    %c0_11 = arith.constant 0 : index
    %8 = vector.load %arg6[%c0_10, %c0_11] : memref<1x128xf32, #tpu.memory_space<vmem>>, vector<1x128xf32>
    %9 = vector.broadcast %8 : vector<1x128xf32> to vector<64x128xf32>
    %10 = arith.addf %7, %9 : vector<64x128xf32>
    %c0_12 = arith.constant 0 : index
    %c0_13 = arith.constant 0 : index
    %11 = vector.load %arg7[%c0_12, %c0_13] : memref<128x128xbf16, #tpu.memory_space<vmem>>, vector<128x128xbf16>
    %cst_14 = arith.constant dense<0.000000e+00> : vector<64x128xf32>
    %12 = tpu.matmul %3, %11, %cst_14 {dimension_numbers = #tpu.dot_dimension_numbers<[1], [0], [0], [1], [0, 0, 1, 1], [], []>} : vector<64x128xbf16>, vector<128x128xbf16>, vector<64x128xf32> -> vector<64x128xf32>
    %c0_15 = arith.constant 0 : index
    %c0_16 = arith.constant 0 : index
    %13 = vector.load %arg8[%c0_15, %c0_16] : memref<1x128xf32, #tpu.memory_space<vmem>>, vector<1x128xf32>
    %14 = vector.broadcast %13 : vector<1x128xf32> to vector<64x128xf32>
    %15 = arith.addf %12, %14 : vector<64x128xf32>
    %c0_17 = arith.constant 0 : index
    %c0_18 = arith.constant 0 : index
    %16 = vector.load %arg9[%c0_17, %c0_18] : memref<128x128xbf16, #tpu.memory_space<vmem>>, vector<128x128xbf16>
    %cst_19 = arith.constant dense<0.000000e+00> : vector<64x128xf32>
    %17 = tpu.matmul %5, %16, %cst_19 {dimension_numbers = #tpu.dot_dimension_numbers<[1], [0], [0], [1], [0, 0, 1, 1], [], []>} : vector<64x128xbf16>, vector<128x128xbf16>, vector<64x128xf32> -> vector<64x128xf32>
    %c0_20 = arith.constant 0 : index
    %c0_21 = arith.constant 0 : index
    %18 = vector.load %arg10[%c0_20, %c0_21] : memref<1x128xf32, #tpu.memory_space<vmem>>, vector<1x128xf32>
    %19 = vector.broadcast %18 : vector<1x128xf32> to vector<64x128xf32>
    %20 = arith.addf %17, %19 : vector<64x128xf32>
    %cst_22 = arith.constant 0.176776692 : f32
    %21 = vector.broadcast %cst_22 : f32 to vector<64x128xf32>
    %22 = arith.mulf %10, %21 : vector<64x128xf32>
    %23 = arith.truncf %22 : vector<64x128xf32> to vector<64x128xbf16>
    %24 = vector.extract_strided_slice %23 {offsets = [0, 0], sizes = [64, 32], strides = [1, 1]} : vector<64x128xbf16> to vector<64x32xbf16>
    %25 = vector.extract_strided_slice %23 {offsets = [0, 32], sizes = [64, 32], strides = [1, 1]} : vector<64x128xbf16> to vector<64x32xbf16>
    %26 = vector.extract_strided_slice %23 {offsets = [0, 64], sizes = [64, 32], strides = [1, 1]} : vector<64x128xbf16> to vector<64x32xbf16>
    %27 = vector.extract_strided_slice %23 {offsets = [0, 96], sizes = [64, 32], strides = [1, 1]} : vector<64x128xbf16> to vector<64x32xbf16>
    %28 = vector.shape_cast %24 : vector<64x32xbf16> to vector<1x64x32xbf16>
    %29 = vector.shape_cast %25 : vector<64x32xbf16> to vector<1x64x32xbf16>
    %30 = vector.shape_cast %26 : vector<64x32xbf16> to vector<1x64x32xbf16>
    %31 = vector.shape_cast %27 : vector<64x32xbf16> to vector<1x64x32xbf16>
    %32 = tpu.concatenate %28, %29, %30, %31 in 0 : vector<1x64x32xbf16>, vector<1x64x32xbf16>, vector<1x64x32xbf16>, vector<1x64x32xbf16> -> vector<4x64x32xbf16>
    %33 = arith.truncf %15 : vector<64x128xf32> to vector<64x128xbf16>
    %34 = vector.extract_strided_slice %33 {offsets = [0, 0], sizes = [64, 32], strides = [1, 1]} : vector<64x128xbf16> to vector<64x32xbf16>
    %35 = vector.extract_strided_slice %33 {offsets = [0, 32], sizes = [64, 32], strides = [1, 1]} : vector<64x128xbf16> to vector<64x32xbf16>
    %36 = vector.extract_strided_slice %33 {offsets = [0, 64], sizes = [64, 32], strides = [1, 1]} : vector<64x128xbf16> to vector<64x32xbf16>
    %37 = vector.extract_strided_slice %33 {offsets = [0, 96], sizes = [64, 32], strides = [1, 1]} : vector<64x128xbf16> to vector<64x32xbf16>
    %38 = vector.shape_cast %34 : vector<64x32xbf16> to vector<1x64x32xbf16>
    %39 = vector.shape_cast %35 : vector<64x32xbf16> to vector<1x64x32xbf16>
    %40 = vector.shape_cast %36 : vector<64x32xbf16> to vector<1x64x32xbf16>
    %41 = vector.shape_cast %37 : vector<64x32xbf16> to vector<1x64x32xbf16>
    %42 = tpu.concatenate %38, %39, %40, %41 in 0 : vector<1x64x32xbf16>, vector<1x64x32xbf16>, vector<1x64x32xbf16>, vector<1x64x32xbf16> -> vector<4x64x32xbf16>
    %43 = arith.truncf %20 : vector<64x128xf32> to vector<64x128xbf16>
    %44 = vector.extract_strided_slice %43 {offsets = [0, 0], sizes = [64, 32], strides = [1, 1]} : vector<64x128xbf16> to vector<64x32xbf16>
    %45 = vector.extract_strided_slice %43 {offsets = [0, 32], sizes = [64, 32], strides = [1, 1]} : vector<64x128xbf16> to vector<64x32xbf16>
    %46 = vector.extract_strided_slice %43 {offsets = [0, 64], sizes = [64, 32], strides = [1, 1]} : vector<64x128xbf16> to vector<64x32xbf16>
    %47 = vector.extract_strided_slice %43 {offsets = [0, 96], sizes = [64, 32], strides = [1, 1]} : vector<64x128xbf16> to vector<64x32xbf16>
    %48 = vector.shape_cast %44 : vector<64x32xbf16> to vector<1x64x32xbf16>
    %49 = vector.shape_cast %45 : vector<64x32xbf16> to vector<1x64x32xbf16>
    %50 = vector.shape_cast %46 : vector<64x32xbf16> to vector<1x64x32xbf16>
    %51 = vector.shape_cast %47 : vector<64x32xbf16> to vector<1x64x32xbf16>
    %52 = tpu.concatenate %48, %49, %50, %51 in 0 : vector<1x64x32xbf16>, vector<1x64x32xbf16>, vector<1x64x32xbf16>, vector<1x64x32xbf16> -> vector<4x64x32xbf16>
    "tpu.trace_start"() <{level = 10 : i32, message = "hqd,hkd->hqk"}> : () -> ()
    %cst_23 = arith.constant dense<0.000000e+00> : vector<4x64x64xf32>
    %53 = tpu.matmul %32, %42, %cst_23 {dimension_numbers = #tpu.dot_dimension_numbers<[2], [2], [1], [1], [0, 0, 0, 1, 1, 1], [0], [0]>} : vector<4x64x32xbf16>, vector<4x64x32xbf16>, vector<4x64x64xf32> -> vector<4x64x64xf32>
    "tpu.trace_stop"() : () -> ()
    %c0_24 = arith.constant 0 : index
    %c0_25 = arith.constant 0 : index
    %54 = vector.load %arg4[%c0_24, %c0_25] : memref<64x64xf32, #tpu.memory_space<vmem>>, vector<64x64xf32>
    %cst_26 = arith.constant 0.000000e+00 : f32
    %55 = vector.broadcast %cst_26 : f32 to vector<64x64xf32>
    %56 = arith.cmpf oeq, %54, %55 : vector<64x64xf32>
    %57 = vector.shape_cast %56 : vector<64x64xi1> to vector<1x64x64xi1>
    %cst_27 = arith.constant -1.000000e+09 : f32
    %58 = vector.shape_cast %57 : vector<1x64x64xi1> to vector<1x64x64xi1>
    %59 = vector.broadcast %58 : vector<1x64x64xi1> to vector<4x64x64xi1>
    %60 = vector.broadcast %cst_27 : f32 to vector<4x64x64xf32>
    %61 = arith.select %59, %60, %53 : vector<4x64x64xi1>, vector<4x64x64xf32>
    %cst_28 = arith.constant dense<0xFF800000> : vector<4x64xf32>
    %62 = vector.multi_reduction <maximumf>, %61, %cst_28 [2] : vector<4x64x64xf32> to vector<4x64xf32>
    %63 = vector.shape_cast %62 : vector<4x64xf32> to vector<4x64x1xf32>
    %64 = vector.broadcast %63 : vector<4x64x1xf32> to vector<4x64x64xf32>
    %65 = arith.subf %61, %64 : vector<4x64x64xf32>
    %66 = math.exp %65 : vector<4x64x64xf32>
    %cst_29 = arith.constant dense<0.000000e+00> : vector<4x64xf32>
    %67 = vector.multi_reduction <add>, %66, %cst_29 [2] : vector<4x64x64xf32> to vector<4x64xf32>
    %68 = vector.shape_cast %67 : vector<4x64xf32> to vector<4x64x1xf32>
    %69 = arith.truncf %66 : vector<4x64x64xf32> to vector<4x64x64xbf16>
    "tpu.trace_start"() <{level = 10 : i32, message = "hqk,hkd->hqd"}> : () -> ()
    %cst_30 = arith.constant dense<0.000000e+00> : vector<4x64x32xf32>
    %70 = tpu.matmul %69, %52, %cst_30 {dimension_numbers = #tpu.dot_dimension_numbers<[2], [1], [1], [2], [0, 0, 0, 1, 1, 2], [0], [0]>} : vector<4x64x64xbf16>, vector<4x64x32xbf16>, vector<4x64x32xf32> -> vector<4x64x32xf32>
    "tpu.trace_stop"() : () -> ()
    %71 = tpu.reciprocal %68 {approx = true} : vector<4x64x1xf32> -> vector<4x64x1xf32>
    %72 = vector.broadcast %71 : vector<4x64x1xf32> to vector<4x64x32xf32>
    %73 = arith.mulf %70, %72 : vector<4x64x32xf32>
    %74 = vector.extract_strided_slice %73 {offsets = [0, 0, 0], sizes = [1, 64, 32], strides = [1, 1, 1]} : vector<4x64x32xf32> to vector<1x64x32xf32>
    %75 = vector.shape_cast %74 : vector<1x64x32xf32> to vector<64x32xf32>
    %76 = vector.extract_strided_slice %73 {offsets = [1, 0, 0], sizes = [1, 64, 32], strides = [1, 1, 1]} : vector<4x64x32xf32> to vector<1x64x32xf32>
    %77 = vector.shape_cast %76 : vector<1x64x32xf32> to vector<64x32xf32>
    %78 = vector.extract_strided_slice %73 {offsets = [2, 0, 0], sizes = [1, 64, 32], strides = [1, 1, 1]} : vector<4x64x32xf32> to vector<1x64x32xf32>
    %79 = vector.shape_cast %78 : vector<1x64x32xf32> to vector<64x32xf32>
    %80 = vector.extract_strided_slice %73 {offsets = [3, 0, 0], sizes = [1, 64, 32], strides = [1, 1, 1]} : vector<4x64x32xf32> to vector<1x64x32xf32>
    %81 = vector.shape_cast %80 : vector<1x64x32xf32> to vector<64x32xf32>
    %82 = tpu.concatenate %75, %77, %79, %81 in 1 : vector<64x32xf32>, vector<64x32xf32>, vector<64x32xf32>, vector<64x32xf32> -> vector<64x128xf32>
    %83 = arith.truncf %82 : vector<64x128xf32> to vector<64x128xbf16>
    %c0_31 = arith.constant 0 : index
    %c0_32 = arith.constant 0 : index
    %84 = vector.load %arg11[%c0_31, %c0_32] : memref<128x128xbf16, #tpu.memory_space<vmem>>, vector<128x128xbf16>
    %cst_33 = arith.constant dense<0.000000e+00> : vector<64x128xf32>
    %85 = tpu.matmul %83, %84, %cst_33 {dimension_numbers = #tpu.dot_dimension_numbers<[1], [0], [0], [1], [0, 0, 1, 1], [], []>} : vector<64x128xbf16>, vector<128x128xbf16>, vector<64x128xf32> -> vector<64x128xf32>
    %c0_34 = arith.constant 0 : index
    %c0_35 = arith.constant 0 : index
    %86 = vector.load %arg12[%c0_34, %c0_35] : memref<1x128xf32, #tpu.memory_space<vmem>>, vector<1x128xf32>
    %87 = vector.broadcast %86 : vector<1x128xf32> to vector<64x128xf32>
    %88 = arith.addf %85, %87 : vector<64x128xf32>
    %c0_36 = arith.constant 0 : index
    %c0_37 = arith.constant 0 : index
    %c0_38 = arith.constant 0 : index
    %89 = vector.load %arg13[%c0_36, %c0_37, %c0_38] : memref<1x64x128xf32, #tpu.memory_space<vmem>>, vector<1x64x128xf32>
    %90 = vector.shape_cast %89 : vector<1x64x128xf32> to vector<64x128xf32>
    %91 = vector.shape_cast %88 : vector<64x128xf32> to vector<1x64x128xf32>
    tpu.vector_store %arg13[%c0_36, %c0_37, %c0_38], %91 {strides = array<i32>} : memref<1x64x128xf32, #tpu.memory_space<vmem>>, vector<1x64x128xf32>,
    return
  }
  func.func @transform_0(%arg0: i32) -> (i32, i32, i32) {
    %c0_i32 = arith.constant 0 : i32
    %c0_i32_0 = arith.constant 0 : i32
    %c0_i32_1 = arith.constant 0 : i32
    return %arg0, %c0_i32, %c0_i32_0 : i32, i32, i32
  }
  func.func @transform_1(%arg0: i32) -> (i32, i32, i32) {
    %c0_i32 = arith.constant 0 : i32
    %c0_i32_0 = arith.constant 0 : i32
    %c0_i32_1 = arith.constant 0 : i32
    return %arg0, %c0_i32, %c0_i32_0 : i32, i32, i32
  }
  func.func @transform_2(%arg0: i32) -> (i32, i32, i32) {
    %c0_i32 = arith.constant 0 : i32
    %c0_i32_0 = arith.constant 0 : i32
    %c0_i32_1 = arith.constant 0 : i32
    return %arg0, %c0_i32, %c0_i32_0 : i32, i32, i32
  }
  func.func @transform_3(%arg0: i32) -> (i32, i32) {
    %c0_i32 = arith.constant 0 : i32
    %c0_i32_0 = arith.constant 0 : i32
    %c0_i32_1 = arith.constant 0 : i32
    return %c0_i32, %c0_i32_0 : i32, i32
  }
  func.func @transform_4(%arg0: i32) -> (i32, i32) {
    %c0_i32 = arith.constant 0 : i32
    %c0_i32_0 = arith.constant 0 : i32
    %c0_i32_1 = arith.constant 0 : i32
    return %c0_i32, %c0_i32_0 : i32, i32
  }
  func.func @transform_5(%arg0: i32) -> (i32, i32) {
    %c0_i32 = arith.constant 0 : i32
    %c0_i32_0 = arith.constant 0 : i32
    %c0_i32_1 = arith.constant 0 : i32
    return %c0_i32, %c0_i32_0 : i32, i32
  }
  func.func @transform_6(%arg0: i32) -> (i32, i32) {
    %c0_i32 = arith.constant 0 : i32
    %c0_i32_0 = arith.constant 0 : i32
    %c0_i32_1 = arith.constant 0 : i32
    return %c0_i32, %c0_i32_0 : i32, i32
  }
  func.func @transform_7(%arg0: i32) -> (i32, i32) {
    %c0_i32 = arith.constant 0 : i32
    %c0_i32_0 = arith.constant 0 : i32
    %c0_i32_1 = arith.constant 0 : i32
    return %c0_i32, %c0_i32_0 : i32, i32
  }
  func.func @transform_8(%arg0: i32) -> (i32, i32) {
    %c0_i32 = arith.constant 0 : i32
    %c0_i32_0 = arith.constant 0 : i32
    %c0_i32_1 = arith.constant 0 : i32
    return %c0_i32, %c0_i32_0 : i32, i32
  }
  func.func @transform_9(%arg0: i32) -> (i32, i32) {
    %c0_i32 = arith.constant 0 : i32
    %c0_i32_0 = arith.constant 0 : i32
    %c0_i32_1 = arith.constant 0 : i32
    return %c0_i32, %c0_i32_0 : i32, i32
  }
  func.func @transform_10(%arg0: i32) -> (i32, i32) {
    %c0_i32 = arith.constant 0 : i32
    %c0_i32_0 = arith.constant 0 : i32
    %c0_i32_1 = arith.constant 0 : i32
    return %c0_i32, %c0_i32_0 : i32, i32
  }
  func.func @transform_11(%arg0: i32) -> (i32, i32) {
    %c0_i32 = arith.constant 0 : i32
    %c0_i32_0 = arith.constant 0 : i32
    %c0_i32_1 = arith.constant 0 : i32
    return %c0_i32, %c0_i32_0 : i32, i32
  }
  func.func @transform_12(%arg0: i32) -> (i32, i32, i32) {
    %c0_i32 = arith.constant 0 : i32
    %c0_i32_0 = arith.constant 0 : i32
    %c0_i32_1 = arith.constant 0 : i32
    return %arg0, %c0_i32, %c0_i32_0 : i32, i32, i32
  }
}

</mosaic_0001>

<llo_original>
// kernel: tpu_custom_call.1
$region0: #{tpu_custom_call.1}
  #allocation0 [shape = 'u32[]', space=smem, size = 0x4, offset = 0x4, fixed_abs, tag = 'smem constant byte address 0x4 - core index']
  #allocation1 [shape = 'u32[144,128]{1,0:T(1,128)}', space=vmem, size = 0x12000, scoped, tag = 'internal scratch']
  %s0 = inlined_call_operand.hbm [shape: bf16[2,64,128], index: 0, kind: input, shape index: {}]
  %s1 = inlined_call_operand.hbm [shape: bf16[2,64,128], index: 1, kind: input, shape index: {}]
  %s2 = inlined_call_operand.hbm [shape: bf16[2,64,128], index: 2, kind: input, shape index: {}]
  %s3 = inlined_call_operand.hbm [shape: f32[64,64], index: 3, kind: input, shape index: {}]
  %s4 = inlined_call_operand.hbm [shape: bf16[128,128], index: 4, kind: input, shape index: {}]
  %s5 = inlined_call_operand.vmem [shape: f32[1,128], index: 5, kind: input, shape index: {}]
  %s6 = inlined_call_operand.hbm [shape: bf16[128,128], index: 6, kind: input, shape index: {}]
  %s7 = inlined_call_operand.vmem [shape: f32[1,128], index: 7, kind: input, shape index: {}]
  %s8 = inlined_call_operand.hbm [shape: bf16[128,128], index: 8, kind: input, shape index: {}]
  %s9 = inlined_call_operand.vmem [shape: f32[1,128], index: 9, kind: input, shape index: {}]
  %s10 = inlined_call_operand.hbm [shape: bf16[128,128], index: 10, kind: input, shape index: {}]
  %s11 = inlined_call_operand.vmem [shape: f32[1,128], index: 11, kind: input, shape index: {}]
  %s12 = inlined_call_operand.hbm [shape: f32[2,64,128], index: 12, kind: output, shape index: {}]
  %s13 = sld [smem:[#allocation0]]
  $region113: #{tpu_custom_call.1} parent=0
    _
  %s15 = ssub.s32 1, %s13
  %s16 = scalar_select 0, %s15, %s13
  $region1: #{tpu_custom_call.1} parent=0
    #allocation2 [shape = 'u8[32768]{0}', space=vmem, size = 0x8000, scoped, tag = 'input window, operand 0']
    #allocation3 [shape = 's32[2]{0}', space=sflag, size = 0x8, scoped, tag = 'scoped memory for tpu_custom_call.1']
    #allocation4 [shape = 's32[2]{0}', space=sflag, size = 0x8, scoped, tag = 'scoped memory for tpu_custom_call.1']
    #allocation5 [shape = 'u8[32768]{0}', space=vmem, size = 0x8000, scoped, tag = 'input window, operand 1']
    #allocation6 [shape = 's32[2]{0}', space=sflag, size = 0x8, scoped, tag = 'scoped memory for tpu_custom_call.1']
    #allocation7 [shape = 'u8[32768]{0}', space=vmem, size = 0x8000, scoped, tag = 'input window, operand 2']
    #allocation8 [shape = 'u8[32768]{0}', space=vmem, size = 0x8000, scoped, tag = 'input window, operand 3, single buffered']
    #allocation9 [shape = 's32[1]{0}', space=sflag, size = 0x4, scoped, tag = 'scoped memory for tpu_custom_call.1']
    #allocation10 [shape = 'u8[32768]{0}', space=vmem, size = 0x8000, scoped, tag = 'input window, operand 4, single buffered']
    #allocation11 [shape = 'u8[32768]{0}', space=vmem, size = 0x8000, scoped, tag = 'input window, operand 6, single buffered']
    #allocation12 [shape = 's32[1]{0}', space=sflag, size = 0x4, scoped, tag = 'scoped memory for tpu_custom_call.1']
    #allocation13 [shape = 'u8[32768]{0}', space=vmem, size = 0x8000, scoped, tag = 'input window, operand 8, single buffered']
    #allocation14 [shape = 'u8[32768]{0}', space=vmem, size = 0x8000, scoped, tag = 'input window, operand 10, single buffered']
    #allocation15 [shape = 's32[1]{0}', space=sflag, size = 0x4, scoped, tag = 'scoped memory for tpu_custom_call.1']
    #allocation16 [shape = 'u8[65536]{0}', space=vmem, size = 0x10000, scoped, tag = 'output window, operand 0']
    %17 = vsyncpa [#allocation3], 0
    %s18 = scalar_lea.sflag [#allocation3], 1
    %19 = vsyncpa %s18, 0
    %20 = vsyncpa [#allocation6], 0
    %s21 = scalar_lea.sflag [#allocation6], 1
    %22 = vsyncpa %s21, 0
    %23 = vsyncpa [#allocation9], 0
    %24 = vsyncpa [#allocation12], 0
    %25 = vsyncpa [#allocation15], 0
    %26 = vsyncpa [#allocation4], 0
    %s27 = scalar_lea.sflag [#allocation4], 1
    %28 = vsyncpa %s27, 0
    loop: start=0, step=1, limit=4
    $region2: #{tpu_custom_call.1} parent=1 // loop_pre_header
      _
    $region3: #{tpu_custom_call.1} parent=1 // loop_header
      %s30 = sphi 0, %s34
      %p31 = scmp.ge.s32.totalorder %s30, 4
      %s40 = sphi 0, %s42
      %s43 = sphi 0, %s40
      %s44 = sphi 0, %s43
      %s60 = sphi 0, %s44
      %s66 = sphi 0, %s68
      %s69 = sphi 0, %s66
      %s70 = sphi 0, %s69
      %s86 = sphi 0, %s70
      %s92 = sphi 0, %s94
      %s95 = sphi 0, %s92
      %s96 = sphi 0, %s95
      %s112 = sphi 0, %s96
      %s116 = sphi 0, %s116
      %s118 = sphi 0, %s116
      %s119 = sphi 0, %s118
      %s133 = sphi 0, %s119
      %s137 = sphi 0, %s137
      %s139 = sphi 0, %s137
      %s140 = sphi 0, %s139
      %s154 = sphi 0, %s140
      %s158 = sphi 0, %s158
      %s160 = sphi 0, %s158
      %s161 = sphi 0, %s160
      %s175 = sphi 0, %s161
      %s179 = sphi 0, %s179
      %s181 = sphi 0, %s179
      %s182 = sphi 0, %s181
      %s196 = sphi 0, %s182
      %s200 = sphi 0, %s200
      %s202 = sphi 0, %s200
      %s203 = sphi 0, %s202
      %s217 = sphi 0, %s203
      %s221 = sphi 0, %s221
      %s223 = sphi 0, %s221
      %s224 = sphi 0, %s223
      %s238 = sphi 0, %s224
      %s242 = sphi 0, %s242
      %s244 = sphi 0, %s242
      %s245 = sphi 0, %s244
      %s259 = sphi 0, %s245
      %s263 = sphi 0, %s263
      %s265 = sphi 0, %s263
      %s266 = sphi 0, %s265
      %s280 = sphi 0, %s266
      %s284 = sphi 0, %s284
      %s286 = sphi 0, %s284
      %s287 = sphi 0, %s286
      %s301 = sphi 0, %s287
      %s307 = sphi 0, %s309
      %s310 = sphi 0, %s307
      %s311 = sphi 0, %s310
      %s327 = sphi 0, %s311
    $region4: #{tpu_custom_call.1} parent=1 // loop_header_branch
      %33 = sbr.rel (%p31) target = $region8
    $region5: #{tpu_custom_call.1} parent=1 // loop_body
      %s35 = ssub.s32 %s30, 1
      %s36 = ssub.s32 %s30, 2
      %s37 = sadd.s32 %s30, 1
      %s38 = ssub.s32 %s30, %s37
      %p39 = scmp.eq.s32.totalorder %s38, 0
      %s41 = sadd.s32 %s40, 1
      %s42 = scalar_select %p39, %s40, %s41
      %p45 = pneg %p39
      %p46 = scmp.eq.s32.totalorder %s30, 1
      %p47 = por %p45, %p46
      %p48 = scmp.ne.s32.totalorder %s40, %s43
      %p49 = scmp.eq.s32.totalorder %s30, 0
      %p50 = por %p48, %p49
      %p51 = scmp.ne.s32.totalorder %s40, %s43
      %p52 = scmp.eq.s32.totalorder %s35, 1
      %p53 = por %p51, %p52
      %p54 = scmp.ne.s32.totalorder %s43, %s44
      %p55 = scmp.eq.s32.totalorder %s35, 0
      %p56 = por %p54, %p55
      %p57 = scmp.ne.s32.totalorder %s43, %s44
      %p58 = scmp.eq.s32.totalorder %s36, 1
      %p59 = por %p57, %p58
      %p61 = scmp.ne.s32.totalorder %s44, %s60
      %p62 = scmp.eq.s32.totalorder %s36, 0
      %p63 = por %p61, %p62
      %s64 = ssub.s32 %s30, %s37
      %p65 = scmp.eq.s32.totalorder %s64, 0
      %s67 = sadd.s32 %s66, 1
      %s68 = scalar_select %p65, %s66, %s67
      %p71 = pneg %p65
      %p72 = scmp.eq.s32.totalorder %s30, 1
      %p73 = por %p71, %p72
      %p74 = scmp.ne.s32.totalorder %s66, %s69
      %p75 = scmp.eq.s32.totalorder %s30, 0
      %p76 = por %p74, %p75
      %p77 = scmp.ne.s32.totalorder %s66, %s69
      %p78 = scmp.eq.s32.totalorder %s35, 1
      %p79 = por %p77, %p78
      %p80 = scmp.ne.s32.totalorder %s69, %s70
      %p81 = scmp.eq.s32.totalorder %s35, 0
      %p82 = por %p80, %p81
      %p83 = scmp.ne.s32.totalorder %s69, %s70
      %p84 = scmp.eq.s32.totalorder %s36, 1
      %p85 = por %p83, %p84
      %p87 = scmp.ne.s32.totalorder %s70, %s86
      %p88 = scmp.eq.s32.totalorder %s36, 0
      %p89 = por %p87, %p88
      %s90 = ssub.s32 %s30, %s37
      %p91 = scmp.eq.s32.totalorder %s90, 0
      %s93 = sadd.s32 %s92, 1
      %s94 = scalar_select %p91, %s92, %s93
      %p97 = pneg %p91
      %p98 = scmp.eq.s32.totalorder %s30, 1
      %p99 = por %p97, %p98
      %p100 = scmp.ne.s32.totalorder %s92, %s95
      %p101 = scmp.eq.s32.totalorder %s30, 0
      %p102 = por %p100, %p101
      %p103 = scmp.ne.s32.totalorder %s92, %s95
      %p104 = scmp.eq.s32.totalorder %s35, 1
      %p105 = por %p103, %p104
      %p106 = scmp.ne.s32.totalorder %s95, %s96
      %p107 = scmp.eq.s32.totalorder %s35, 0
      %p108 = por %p106, %p107
      %p109 = scmp.ne.s32.totalorder %s95, %s96
      %p110 = scmp.eq.s32.totalorder %s36, 1
      %p111 = por %p109, %p110
      %p113 = scmp.ne.s32.totalorder %s96, %s112
      %p114 = scmp.eq.s32.totalorder %s36, 0
      %p115 = por %p113, %p114
      %s117 = sadd.s32 %s116, 1
      %p120 = scmp.eq.s32.totalorder %s30, 1
      %p121 = scmp.ne.s32.totalorder %s116, %s118
      %p122 = scmp.eq.s32.totalorder %s30, 0
      %p123 = por %p121, %p122
      %p124 = scmp.ne.s32.totalorder %s116, %s118
      %p125 = scmp.eq.s32.totalorder %s35, 1
      %p126 = por %p124, %p125
      %p127 = scmp.ne.s32.totalorder %s118, %s119
      %p128 = scmp.eq.s32.totalorder %s35, 0
      %p129 = por %p127, %p128
      %p130 = scmp.ne.s32.totalorder %s118, %s119
      %p131 = scmp.eq.s32.totalorder %s36, 1
      %p132 = por %p130, %p131
      %p134 = scmp.ne.s32.totalorder %s119, %s133
      %p135 = scmp.eq.s32.totalorder %s36, 0
      %p136 = por %p134, %p135
      %s138 = sadd.s32 %s137, 1
      %p141 = scmp.eq.s32.totalorder %s30, 1
      %p142 = scmp.ne.s32.totalorder %s137, %s139
      %p143 = scmp.eq.s32.totalorder %s30, 0
      %p144 = por %p142, %p143
      %p145 = scmp.ne.s32.totalorder %s137, %s139
      %p146 = scmp.eq.s32.totalorder %s35, 1
      %p147 = por %p145, %p146
      %p148 = scmp.ne.s32.totalorder %s139, %s140
      %p149 = scmp.eq.s32.totalorder %s35, 0
      %p150 = por %p148, %p149
      %p151 = scmp.ne.s32.totalorder %s139, %s140
      %p152 = scmp.eq.s32.totalorder %s36, 1
      %p153 = por %p151, %p152
      %p155 = scmp.ne.s32.totalorder %s140, %s154
      %p156 = scmp.eq.s32.totalorder %s36, 0
      %p157 = por %p155, %p156
      %s159 = sadd.s32 %s158, 1
      %p162 = scmp.eq.s32.totalorder %s30, 1
      %p163 = scmp.ne.s32.totalorder %s158, %s160
      %p164 = scmp.eq.s32.totalorder %s30, 0
      %p165 = por %p163, %p164
      %p166 = scmp.ne.s32.totalorder %s158, %s160
      %p167 = scmp.eq.s32.totalorder %s35, 1
      %p168 = por %p166, %p167
      %p169 = scmp.ne.s32.totalorder %s160, %s161
      %p170 = scmp.eq.s32.totalorder %s35, 0
      %p171 = por %p169, %p170
      %p172 = scmp.ne.s32.totalorder %s160, %s161
      %p173 = scmp.eq.s32.totalorder %s36, 1
      %p174 = por %p172, %p173
      %p176 = scmp.ne.s32.totalorder %s161, %s175
      %p177 = scmp.eq.s32.totalorder %s36, 0
      %p178 = por %p176, %p177
      %s180 = sadd.s32 %s179, 1
      %p183 = scmp.eq.s32.totalorder %s30, 1
      %p184 = scmp.ne.s32.totalorder %s179, %s181
      %p185 = scmp.eq.s32.totalorder %s30, 0
      %p186 = por %p184, %p185
      %p187 = scmp.ne.s32.totalorder %s179, %s181
      %p188 = scmp.eq.s32.totalorder %s35, 1
      %p189 = por %p187, %p188
      %p190 = scmp.ne.s32.totalorder %s181, %s182
      %p191 = scmp.eq.s32.totalorder %s35, 0
      %p192 = por %p190, %p191
      %p193 = scmp.ne.s32.totalorder %s181, %s182
      %p194 = scmp.eq.s32.totalorder %s36, 1
      %p195 = por %p193, %p194
      %p197 = scmp.ne.s32.totalorder %s182, %s196
      %p198 = scmp.eq.s32.totalorder %s36, 0
      %p199 = por %p197, %p198
      %s201 = sadd.s32 %s200, 1
      %p204 = scmp.eq.s32.totalorder %s30, 1
      %p205 = scmp.ne.s32.totalorder %s200, %s202
      %p206 = scmp.eq.s32.totalorder %s30, 0
      %p207 = por %p205, %p206
      %p208 = scmp.ne.s32.totalorder %s200, %s202
      %p209 = scmp.eq.s32.totalorder %s35, 1
      %p210 = por %p208, %p209
      %p211 = scmp.ne.s32.totalorder %s202, %s203
      %p212 = scmp.eq.s32.totalorder %s35, 0
      %p213 = por %p211, %p212
      %p214 = scmp.ne.s32.totalorder %s202, %s203
      %p215 = scmp.eq.s32.totalorder %s36, 1
      %p216 = por %p214, %p215
      %p218 = scmp.ne.s32.totalorder %s203, %s217
      %p219 = scmp.eq.s32.totalorder %s36, 0
      %p220 = por %p218, %p219
      %s222 = sadd.s32 %s221, 1
      %p225 = scmp.eq.s32.totalorder %s30, 1
      %p226 = scmp.ne.s32.totalorder %s221, %s223
      %p227 = scmp.eq.s32.totalorder %s30, 0
      %p228 = por %p226, %p227
      %p229 = scmp.ne.s32.totalorder %s221, %s223
      %p230 = scmp.eq.s32.totalorder %s35, 1
      %p231 = por %p229, %p230
      %p232 = scmp.ne.s32.totalorder %s223, %s224
      %p233 = scmp.eq.s32.totalorder %s35, 0
      %p234 = por %p232, %p233
      %p235 = scmp.ne.s32.totalorder %s223, %s224
      %p236 = scmp.eq.s32.totalorder %s36, 1
      %p237 = por %p235, %p236
      %p239 = scmp.ne.s32.totalorder %s224, %s238
      %p240 = scmp.eq.s32.totalorder %s36, 0
      %p241 = por %p239, %p240
      %s243 = sadd.s32 %s242, 1
      %p246 = scmp.eq.s32.totalorder %s30, 1
      %p247 = scmp.ne.s32.totalorder %s242, %s244
      %p248 = scmp.eq.s32.totalorder %s30, 0
      %p249 = por %p247, %p248
      %p250 = scmp.ne.s32.totalorder %s242, %s244
      %p251 = scmp.eq.s32.totalorder %s35, 1
      %p252 = por %p250, %p251
      %p253 = scmp.ne.s32.totalorder %s244, %s245
      %p254 = scmp.eq.s32.totalorder %s35, 0
      %p255 = por %p253, %p254
      %p256 = scmp.ne.s32.totalorder %s244, %s245
      %p257 = scmp.eq.s32.totalorder %s36, 1
      %p258 = por %p256, %p257
      %p260 = scmp.ne.s32.totalorder %s245, %s259
      %p261 = scmp.eq.s32.totalorder %s36, 0
      %p262 = por %p260, %p261
      %s264 = sadd.s32 %s263, 1
      %p267 = scmp.eq.s32.totalorder %s30, 1
      %p268 = scmp.ne.s32.totalorder %s263, %s265
      %p269 = scmp.eq.s32.totalorder %s30, 0
      %p270 = por %p268, %p269
      %p271 = scmp.ne.s32.totalorder %s263, %s265
      %p272 = scmp.eq.s32.totalorder %s35, 1
      %p273 = por %p271, %p272
      %p274 = scmp.ne.s32.totalorder %s265, %s266
      %p275 = scmp.eq.s32.totalorder %s35, 0
      %p276 = por %p274, %p275
      %p277 = scmp.ne.s32.totalorder %s265, %s266
      %p278 = scmp.eq.s32.totalorder %s36, 1
      %p279 = por %p277, %p278
      %p281 = scmp.ne.s32.totalorder %s266, %s280
      %p282 = scmp.eq.s32.totalorder %s36, 0
      %p283 = por %p281, %p282
      %s285 = sadd.s32 %s284, 1
      %p288 = scmp.eq.s32.totalorder %s30, 1
      %p289 = scmp.ne.s32.totalorder %s284, %s286
      %p290 = scmp.eq.s32.totalorder %s30, 0
      %p291 = por %p289, %p290
      %p292 = scmp.ne.s32.totalorder %s284, %s286
      %p293 = scmp.eq.s32.totalorder %s35, 1
      %p294 = por %p292, %p293
      %p295 = scmp.ne.s32.totalorder %s286, %s287
      %p296 = scmp.eq.s32.totalorder %s35, 0
      %p297 = por %p295, %p296
      %p298 = scmp.ne.s32.totalorder %s286, %s287
      %p299 = scmp.eq.s32.totalorder %s36, 1
      %p300 = por %p298, %p299
      %p302 = scmp.ne.s32.totalorder %s287, %s301
      %p303 = scmp.eq.s32.totalorder %s36, 0
      %p304 = por %p302, %p303
      %s305 = ssub.s32 %s30, %s37
      %p306 = scmp.eq.s32.totalorder %s305, 0
      %s308 = sadd.s32 %s307, 1
      %s309 = scalar_select %p306, %s307, %s308
      %p312 = pneg %p306
      %p313 = scmp.eq.s32.totalorder %s30, 1
      %p314 = por %p312, %p313
      %p315 = scmp.ne.s32.totalorder %s307, %s310
      %p316 = scmp.eq.s32.totalorder %s30, 0
      %p317 = por %p315, %p316
      %p318 = scmp.ne.s32.totalorder %s307, %s310
      %p319 = scmp.eq.s32.totalorder %s35, 1
      %p320 = por %p318, %p319
      %p321 = scmp.ne.s32.totalorder %s310, %s311
      %p322 = scmp.eq.s32.totalorder %s35, 0
      %p323 = por %p321, %p322
      %p324 = scmp.ne.s32.totalorder %s310, %s311
      %p325 = scmp.eq.s32.totalorder %s36, 1
      %p326 = por %p324, %p325
      %p328 = scmp.ne.s32.totalorder %s311, %s327
      %p329 = scmp.eq.s32.totalorder %s36, 0
      %p330 = por %p328, %p329
      %p331 = scmp.le.s32.totalorder 1, %s30
      %p332 = scmp.lt.s32.totalorder %s30, 3
      %p333 = pnand %p331, %p332
      %p334 = pneg %p333
      // Predicated region
      $region9: #{tpu_custom_call.1} parent=5 // pred_check
        _
      $region10: #{tpu_custom_call.1} parent=5 // pred_check_branch
        %336 = sbr.rel (%p333) target = $region12
      $region11: #{tpu_custom_call.1} parent=5 // pred_region
        %s337 = ssub.s32 %s30, 1
        // Predicated region
        $region13: #{tpu_custom_call.1} parent=11 // pred_check
          %p338 = pneg %p129
        $region14: #{tpu_custom_call.1} parent=11 // pred_check_branch
          %340 = sbr.rel (%p338) target = $region16
        $region15: #{tpu_custom_call.1} parent=11 // pred_region
          %s342 = ssub.s32 1024, 1024
          %343 = vsyncadd [#allocation9], %s342
          %s344 = sshll.u32 [#allocation8], 4
          %s345 = int_to_ptr.vmem [resolvable:$true] %s344
          %350 = dma.hbm_to_vmem [thread:$0]  %s3, 1024, %s345, [#allocation9], 128, 128, 8
        $region16: #{tpu_custom_call.1} parent=11 // pred_fallthru
          _
        // Predicated region
        $region17: #{tpu_custom_call.1} parent=11 // pred_check
          %p351 = pneg %p150
        $region18: #{tpu_custom_call.1} parent=11 // pred_check_branch
          %353 = sbr.rel (%p351) target = $region20
        $region19: #{tpu_custom_call.1} parent=11 // pred_region
          %s355 = ssub.s32 1024, 1024
          %356 = vsyncadd [#allocation9], %s355
          %s357 = sshll.u32 [#allocation10], 4
          %s358 = int_to_ptr.vmem [resolvable:$true] %s357
          %363 = dma.hbm_to_vmem [thread:$0]  %s4, 1024, %s358, [#allocation9], 64, 64, 4
        $region20: #{tpu_custom_call.1} parent=11 // pred_fallthru
          _
        // Predicated region
        $region21: #{tpu_custom_call.1} parent=11 // pred_check
          %p364 = pneg %p171
        $region22: #{tpu_custom_call.1} parent=11 // pred_check_branch
          %366 = sbr.rel (%p364) target = $region24
        $region23: #{tpu_custom_call.1} parent=11 // pred_region
          _
        $region24: #{tpu_custom_call.1} parent=11 // pred_fallthru
          _
        // Predicated region
        $region25: #{tpu_custom_call.1} parent=11 // pred_check
          %p367 = pneg %p192
        $region26: #{tpu_custom_call.1} parent=11 // pred_check_branch
          %369 = sbr.rel (%p367) target = $region28
        $region27: #{tpu_custom_call.1} parent=11 // pred_region
          %s371 = ssub.s32 1024, 1024
          %372 = vsyncadd [#allocation12], %s371
          %s373 = sshll.u32 [#allocation11], 4
          %s374 = int_to_ptr.vmem [resolvable:$true] %s373
          %379 = dma.hbm_to_vmem [thread:$0]  %s6, 1024, %s374, [#allocation12], 64, 64, 4
        $region28: #{tpu_custom_call.1} parent=11 // pred_fallthru
          _
        // Predicated region
        $region29: #{tpu_custom_call.1} parent=11 // pred_check
          %p380 = pneg %p213
        $region30: #{tpu_custom_call.1} parent=11 // pred_check_branch
          %382 = sbr.rel (%p380) target = $region32
        $region31: #{tpu_custom_call.1} parent=11 // pred_region
          _
        $region32: #{tpu_custom_call.1} parent=11 // pred_fallthru
          _
        // Predicated region
        $region33: #{tpu_custom_call.1} parent=11 // pred_check
          %p383 = pneg %p234
        $region34: #{tpu_custom_call.1} parent=11 // pred_check_branch
          %385 = sbr.rel (%p383) target = $region36
        $region35: #{tpu_custom_call.1} parent=11 // pred_region
          %s387 = ssub.s32 1024, 1024
          %388 = vsyncadd [#allocation12], %s387
          %s389 = sshll.u32 [#allocation13], 4
          %s390 = int_to_ptr.vmem [resolvable:$true] %s389
          %395 = dma.hbm_to_vmem [thread:$0]  %s8, 1024, %s390, [#allocation12], 64, 64, 4
        $region36: #{tpu_custom_call.1} parent=11 // pred_fallthru
          _
        // Predicated region
        $region37: #{tpu_custom_call.1} parent=11 // pred_check
          %p396 = pneg %p255
        $region38: #{tpu_custom_call.1} parent=11 // pred_check_branch
          %398 = sbr.rel (%p396) target = $region40
        $region39: #{tpu_custom_call.1} parent=11 // pred_region
          _
        $region40: #{tpu_custom_call.1} parent=11 // pred_fallthru
          _
        // Predicated region
        $region41: #{tpu_custom_call.1} parent=11 // pred_check
          %p399 = pneg %p276
        $region42: #{tpu_custom_call.1} parent=11 // pred_check_branch
          %401 = sbr.rel (%p399) target = $region44
        $region43: #{tpu_custom_call.1} parent=11 // pred_region
          %s403 = ssub.s32 1024, 1024
          %404 = vsyncadd [#allocation15], %s403
          %s405 = sshll.u32 [#allocation14], 4
          %s406 = int_to_ptr.vmem [resolvable:$true] %s405
          %411 = dma.hbm_to_vmem [thread:$0]  %s10, 1024, %s406, [#allocation15], 64, 64, 4
        $region44: #{tpu_custom_call.1} parent=11 // pred_fallthru
          _
        // Predicated region
        $region45: #{tpu_custom_call.1} parent=11 // pred_check
          %p412 = pneg %p297
        $region46: #{tpu_custom_call.1} parent=11 // pred_check_branch
          %414 = sbr.rel (%p412) target = $region48
        $region47: #{tpu_custom_call.1} parent=11 // pred_region
          _
        $region48: #{tpu_custom_call.1} parent=11 // pred_fallthru
          _
      $region12: #{tpu_custom_call.1} parent=5 // pred_fallthru
        _
      %p415 = scmp.lt.s32.totalorder %s30, 2
      // Predicated region
      $region49: #{tpu_custom_call.1} parent=5 // pred_check
        %p416 = pneg %p415
      $region50: #{tpu_custom_call.1} parent=5 // pred_check_branch
        %418 = sbr.rel (%p416) target = $region52
      $region51: #{tpu_custom_call.1} parent=5 // pred_region
        // Predicated region
        $region53: #{tpu_custom_call.1} parent=51 // pred_check
          %p419 = pneg %p50
        $region54: #{tpu_custom_call.1} parent=51 // pred_check_branch
          %421 = sbr.rel (%p419) target = $region56
        $region55: #{tpu_custom_call.1} parent=51 // pred_region
          %s422 = sand.u32 %s40, 1
          %s423 = scalar_lea.sflag [#allocation3], %s422
          %s424 = sand.u32 %s40, 1
          %s425 = smul.addr %s424, 32
          %s426 = scalar_lea.vmem [#allocation2], %s425
          %s428 = ssub.s32 512, 512
          %429 = vsyncadd %s423, %s428
          %s430 = smul.addr %s30, 8
          %s431 = smul.addr %s430, 64
          %s432 = scalar_lea.hbm %s0, %s431
          %s433 = sshll.u32 %s426, 4
          %s434 = int_to_ptr.vmem [resolvable:$true] %s433
          %439 = dma.hbm_to_vmem [thread:$0]  %s432, 512, %s434, %s423, 64, 64, 4
        $region56: #{tpu_custom_call.1} parent=51 // pred_fallthru
          _
        // Predicated region
        $region57: #{tpu_custom_call.1} parent=51 // pred_check
          %p440 = pneg %p76
        $region58: #{tpu_custom_call.1} parent=51 // pred_check_branch
          %442 = sbr.rel (%p440) target = $region60
        $region59: #{tpu_custom_call.1} parent=51 // pred_region
          %s443 = sand.u32 %s30, 1
          %s444 = scalar_lea.sflag [#allocation6], %s443
          %s445 = sand.u32 %s66, 1
          %s446 = smul.addr %s445, 32
          %s447 = scalar_lea.vmem [#allocation5], %s446
          %s449 = ssub.s32 512, 512
          %450 = vsyncadd %s444, %s449
          %s451 = smul.addr %s30, 8
          %s452 = smul.addr %s451, 64
          %s453 = scalar_lea.hbm %s1, %s452
          %s454 = sshll.u32 %s447, 4
          %s455 = int_to_ptr.vmem [resolvable:$true] %s454
          %460 = dma.hbm_to_vmem [thread:$0]  %s453, 512, %s455, %s444, 64, 64, 4
        $region60: #{tpu_custom_call.1} parent=51 // pred_fallthru
          _
        // Predicated region
        $region61: #{tpu_custom_call.1} parent=51 // pred_check
          %p461 = pneg %p102
        $region62: #{tpu_custom_call.1} parent=51 // pred_check_branch
          %463 = sbr.rel (%p461) target = $region64
        $region63: #{tpu_custom_call.1} parent=51 // pred_region
          %s464 = sand.u32 %s30, 1
          %s465 = scalar_lea.sflag [#allocation6], %s464
          %s466 = sand.u32 %s92, 1
          %s467 = smul.addr %s466, 32
          %s468 = scalar_lea.vmem [#allocation7], %s467
          %s470 = ssub.s32 512, 512
          %471 = vsyncadd %s465, %s470
          %s472 = smul.addr %s30, 8
          %s473 = smul.addr %s472, 64
          %s474 = scalar_lea.hbm %s2, %s473
          %s475 = sshll.u32 %s468, 4
          %s476 = int_to_ptr.vmem [resolvable:$true] %s475
          %481 = dma.hbm_to_vmem [thread:$0]  %s474, 512, %s476, %s465, 64, 64, 4
        $region64: #{tpu_custom_call.1} parent=51 // pred_fallthru
          _
      $region52: #{tpu_custom_call.1} parent=5 // pred_fallthru
        _
      %p482 = scmp.le.s32.totalorder 1, %s30
      %p483 = scmp.lt.s32.totalorder %s30, 3
      %p484 = pnand %p482, %p483
      %p485 = pneg %p484
      // Predicated region
      $region65: #{tpu_custom_call.1} parent=5 // pred_check
        _
      $region66: #{tpu_custom_call.1} parent=5 // pred_check_branch
        %487 = sbr.rel (%p484) target = $region68
      $region67: #{tpu_custom_call.1} parent=5 // pred_region
        %s488 = ssub.s32 %s30, 1
        %s489 = sand.u32 %s43, 1
        %s490 = scalar_lea.sflag [#allocation3], %s489
        %s491 = sand.u32 %s43, 1
        %s492 = smul.addr %s491, 32
        %s493 = scalar_lea.vmem [#allocation2], %s492
        // Predicated region
        $region69: #{tpu_custom_call.1} parent=67 // pred_check
          %p494 = pneg %p56
        $region70: #{tpu_custom_call.1} parent=67 // pred_check_branch
          %496 = sbr.rel (%p494) target = $region72
        $region71: #{tpu_custom_call.1} parent=67 // pred_region
          %497 = dma.done %s490, 512
        $region72: #{tpu_custom_call.1} parent=67 // pred_fallthru
          _
        %s498 = sand.u32 %s35, 1
        %s499 = scalar_lea.sflag [#allocation6], %s498
        %s500 = sand.u32 %s69, 1
        %s501 = smul.addr %s500, 32
        %s502 = scalar_lea.vmem [#allocation5], %s501
        // Predicated region
        $region73: #{tpu_custom_call.1} parent=67 // pred_check
          %p503 = pneg %p82
        $region74: #{tpu_custom_call.1} parent=67 // pred_check_branch
          %505 = sbr.rel (%p503) target = $region76
        $region75: #{tpu_custom_call.1} parent=67 // pred_region
          %506 = dma.done %s499, 512
        $region76: #{tpu_custom_call.1} parent=67 // pred_fallthru
          _
        %s507 = sand.u32 %s35, 1
        %s508 = scalar_lea.sflag [#allocation6], %s507
        %s509 = sand.u32 %s95, 1
        %s510 = smul.addr %s509, 32
        %s511 = scalar_lea.vmem [#allocation7], %s510
        // Predicated region
        $region77: #{tpu_custom_call.1} parent=67 // pred_check
          %p512 = pneg %p108
        $region78: #{tpu_custom_call.1} parent=67 // pred_check_branch
          %514 = sbr.rel (%p512) target = $region80
        $region79: #{tpu_custom_call.1} parent=67 // pred_region
          %515 = dma.done %s508, 512
        $region80: #{tpu_custom_call.1} parent=67 // pred_fallthru
          _
        // Predicated region
        $region81: #{tpu_custom_call.1} parent=67 // pred_check
          %p516 = pneg %p129
        $region82: #{tpu_custom_call.1} parent=67 // pred_check_branch
          %518 = sbr.rel (%p516) target = $region84
        $region83: #{tpu_custom_call.1} parent=67 // pred_region
          %519 = dma.done [#allocation9], 1024
        $region84: #{tpu_custom_call.1} parent=67 // pred_fallthru
          _
        // Predicated region
        $region85: #{tpu_custom_call.1} parent=67 // pred_check
          %p520 = pneg %p150
        $region86: #{tpu_custom_call.1} parent=67 // pred_check_branch
          %522 = sbr.rel (%p520) target = $region88
        $region87: #{tpu_custom_call.1} parent=67 // pred_region
          %523 = dma.done [#allocation9], 1024
        $region88: #{tpu_custom_call.1} parent=67 // pred_fallthru
          _
        // Predicated region
        $region89: #{tpu_custom_call.1} parent=67 // pred_check
          %p524 = pneg %p192
        $region90: #{tpu_custom_call.1} parent=67 // pred_check_branch
          %526 = sbr.rel (%p524) target = $region92
        $region91: #{tpu_custom_call.1} parent=67 // pred_region
          %527 = dma.done [#allocation12], 1024
        $region92: #{tpu_custom_call.1} parent=67 // pred_fallthru
          _
        // Predicated region
        $region93: #{tpu_custom_call.1} parent=67 // pred_check
          %p528 = pneg %p234
        $region94: #{tpu_custom_call.1} parent=67 // pred_check_branch
          %530 = sbr.rel (%p528) target = $region96
        $region95: #{tpu_custom_call.1} parent=67 // pred_region
          %531 = dma.done [#allocation12], 1024
        $region96: #{tpu_custom_call.1} parent=67 // pred_fallthru
          _
        // Predicated region
        $region97: #{tpu_custom_call.1} parent=67 // pred_check
          %p532 = pneg %p276
        $region98: #{tpu_custom_call.1} parent=67 // pred_check_branch
          %534 = sbr.rel (%p532) target = $region100
        $region99: #{tpu_custom_call.1} parent=67 // pred_region
          %535 = dma.done [#allocation15], 1024
        $region100: #{tpu_custom_call.1} parent=67 // pred_fallthru
          _
        %s536 = sand.u32 %s43, 1
        %s537 = scalar_lea.sflag [#allocation3], %s536
        %s538 = sand.u32 %s43, 1
        %s539 = smul.addr %s538, 32
        %s540 = scalar_lea.vmem [#allocation2], %s539
        %p541 = pneg %p56
        %p542 = pneg %p53
        %s543 = sand.u32 %s35, 1
        %s544 = scalar_lea.sflag [#allocation6], %s543
        %s545 = sand.u32 %s69, 1
        %s546 = smul.addr %s545, 32
        %s547 = scalar_lea.vmem [#allocation5], %s546
        %p548 = pneg %p82
        %p549 = pneg %p79
        %s550 = sand.u32 %s35, 1
        %s551 = scalar_lea.sflag [#allocation6], %s550
        %s552 = sand.u32 %s95, 1
        %s553 = smul.addr %s552, 32
        %s554 = scalar_lea.vmem [#allocation7], %s553
        %p555 = pneg %p108
        %p556 = pneg %p105
        %p557 = pneg %p129
        %p558 = pneg %p126
        %p559 = pneg %p150
        %p560 = pneg %p147
        %p561 = pneg %p171
        %p562 = pneg %p168
        %p563 = pneg %p192
        %p564 = pneg %p189
        %p565 = pneg %p213
        %p566 = pneg %p210
        %p567 = pneg %p234
        %p568 = pneg %p231
        %p569 = pneg %p255
        %p570 = pneg %p252
        %p571 = pneg %p276
        %p572 = pneg %p273
        %p573 = pneg %p297
        %p574 = pneg %p294
        %p575 = pneg %p323
        %p576 = pneg %p320
        %s577 = sand.u32 %s310, 1
        %s578 = scalar_lea.sflag [#allocation4], %s577
        %s579 = sand.u32 %s310, 1
        %s580 = smul.addr %s579, 64
        %s581 = scalar_lea.vmem [#allocation16], %s580
        %v583 = vld [vmem:[%s493] sm:$0xf]
        %v584 = vld [vmem:[%s493 + $0x4] sm:$0xf]
        %v585 = vld [vmem:[%s493 + $0x8] sm:$0xf]
        %v586 = vld [vmem:[%s493 + $0xc] sm:$0xf]
        %v587 = vld [vmem:[%s493 + $0x10] sm:$0xf]
        %v588 = vld [vmem:[%s493 + $0x14] sm:$0xf]
        %v589 = vld [vmem:[%s493 + $0x18] sm:$0xf]
        %v590 = vld [vmem:[%s493 + $0x1c] sm:$0xf]
        %v591 = vld [vmem:[%s502] sm:$0xf]
        %v592 = vld [vmem:[%s502 + $0x4] sm:$0xf]
        %v593 = vld [vmem:[%s502 + $0x8] sm:$0xf]
        %v594 = vld [vmem:[%s502 + $0xc] sm:$0xf]
        %v595 = vld [vmem:[%s502 + $0x10] sm:$0xf]
        %v596 = vld [vmem:[%s502 + $0x14] sm:$0xf]
        %v597 = vld [vmem:[%s502 + $0x18] sm:$0xf]
        %v598 = vld [vmem:[%s502 + $0x1c] sm:$0xf]
        %v599 = vld [vmem:[%s511] sm:$0xf]
        %v600 = vld [vmem:[%s511 + $0x4] sm:$0xf]
        %v601 = vld [vmem:[%s511 + $0x8] sm:$0xf]
        %v602 = vld [vmem:[%s511 + $0xc] sm:$0xf]
        %v603 = vld [vmem:[%s511 + $0x10] sm:$0xf]
        %v604 = vld [vmem:[%s511 + $0x14] sm:$0xf]
        %v605 = vld [vmem:[%s511 + $0x18] sm:$0xf]
        %v606 = vld [vmem:[%s511 + $0x1c] sm:$0xf]
        %v607 = vld [vmem:[#allocation10] sm:$0xf]
        %v608 = vld [vmem:[#allocation10 + $0x4] sm:$0xf]
        %v609 = vld [vmem:[#allocation10 + $0x8] sm:$0xf]
        %v610 = vld [vmem:[#allocation10 + $0xc] sm:$0xf]
        %v611 = vld [vmem:[#allocation10 + $0x10] sm:$0xf]
        %v612 = vld [vmem:[#allocation10 + $0x14] sm:$0xf]
        %v613 = vld [vmem:[#allocation10 + $0x18] sm:$0xf]
        %v614 = vld [vmem:[#allocation10 + $0x1c] sm:$0xf]
        %v615 = vld [vmem:[#allocation10 + $0x20] sm:$0xf]
        %v616 = vld [vmem:[#allocation10 + $0x24] sm:$0xf]
        %v617 = vld [vmem:[#allocation10 + $0x28] sm:$0xf]
        %v618 = vld [vmem:[#allocation10 + $0x2c] sm:$0xf]
        %v619 = vld [vmem:[#allocation10 + $0x30] sm:$0xf]
        %v620 = vld [vmem:[#allocation10 + $0x34] sm:$0xf]
        %v621 = vld [vmem:[#allocation10 + $0x38] sm:$0xf]
        %v622 = vld [vmem:[#allocation10 + $0x3c] sm:$0xf]
        %v623 = vld [vmem:[%s5] sm:$0x1]
        %v625 = vlaneseq
        %v626 = vshrl.u32 %v625, 7
        %v627 = vsub.s32 0, %v626
        %v628 = vrot.slane %v623, %v627
        %v638 = vunpack.c.l.b16 %v583
        %v639 = vunpack.c.l.b16 %v584
        %v640 = vunpack.c.l.b16 %v585
        %v641 = vunpack.c.l.b16 %v586
        %v642 = vunpack.c.l.b16 %v587
        %v643 = vunpack.c.l.b16 %v588
        %v644 = vunpack.c.l.b16 %v589
        %v645 = vunpack.c.l.b16 %v590
        %v646 = vpack.c.b16 %v639, %v638
        %v647 = vpack.c.b16 %v641, %v640
        %v648 = vpack.c.b16 %v643, %v642
        %v649 = vpack.c.b16 %v645, %v644
        %v670 = vunpack.c.l.b16 %v607
        %v671 = vunpack.c.l.b16 %v608
        %v672 = vunpack.c.l.b16 %v609
        %v673 = vunpack.c.l.b16 %v610
        %v674 = vunpack.c.l.b16 %v611
        %v675 = vunpack.c.l.b16 %v612
        %v676 = vunpack.c.l.b16 %v613
        %v677 = vunpack.c.l.b16 %v614
        %v678 = vunpack.c.l.b16 %v615
        %v679 = vunpack.c.l.b16 %v616
        %v680 = vunpack.c.l.b16 %v617
        %v681 = vunpack.c.l.b16 %v618
        %v682 = vunpack.c.l.b16 %v619
        %v683 = vunpack.c.l.b16 %v620
        %v684 = vunpack.c.l.b16 %v621
        %v685 = vunpack.c.l.b16 %v622
        %v686 = vpack.c.b16 %v671, %v670
        %v687 = vpack.c.b16 %v673, %v672
        %v688 = vpack.c.b16 %v675, %v674
        %v689 = vpack.c.b16 %v677, %v676
        %v690 = vpack.c.b16 %v679, %v678
        %v691 = vpack.c.b16 %v681, %v680
        %v692 = vpack.c.b16 %v683, %v682
        %v693 = vpack.c.b16 %v685, %v684
        %702 = vmatprep.subr.bf16.mxu0 0
        %703 = vmatpush1.bf16.msra.mxu0 %v693
        %704 = vmatprep.subr.bf16.mxu0 0
        %705 = vmatpush1.bf16.msra.mxu0 %v692
        %706 = vmatprep.subr.bf16.mxu0 0
        %707 = vmatpush1.bf16.msra.mxu0 %v691
        %708 = vmatprep.subr.bf16.mxu0 0
        %709 = vmatpush1.bf16.msra.mxu0 %v690
        %710 = vmatprep.subr.bf16.mxu0 0
        %711 = vmatpush1.bf16.msra.mxu0 %v689
        %712 = vmatprep.subr.bf16.mxu0 0
        %713 = vmatpush1.bf16.msra.mxu0 %v688
        %714 = vmatprep.subr.bf16.mxu0 0
        %715 = vmatpush1.bf16.msra.mxu0 %v687
        %716 = vmatprep.subr.bf16.mxu0 0
        %717 = vmatpush1.bf16.msra.mxu0 %v686
        %718 = vmatprep.subr.bf16.mxu0 0
        %719 = vmatpush2.bf16.msra.mxu0 0
        %720 = vmatprep.subr.bf16.mxu0 0
        %721 = vmatpush2.bf16.msra.mxu0 0
        %722 = vmatprep.subr.bf16.mxu0 0
        %723 = vmatpush2.bf16.msra.mxu0 0
        %724 = vmatprep.subr.bf16.mxu0 0
        %725 = vmatpush2.bf16.msra.mxu0 0
        %726 = vmatprep.subr.bf16.mxu0 0
        %727 = vmatpush2.bf16.msra.mxu0 0
        %728 = vmatprep.subr.bf16.mxu0 0
        %729 = vmatpush2.bf16.msra.mxu0 0
        %730 = vmatprep.subr.bf16.mxu0 0
        %731 = vmatpush2.bf16.msra.mxu0 0
        %732 = vmatprep.subr.bf16.mxu0 0
        %733 = vmatpush2.bf16.msra.mxu0 0
        %734 = vmatprep.mubr.bf16.mxu0 0
        %735 = vmatmul.mubr.bf16.gmra.mxu0 %v646
        %v736 = vpop.f32.mrf.mxu0
        %v737 = vadd.f32 %v628, %v736
        %v738 = vpop.f32.mrf.mxu0
        %v739 = vpop.f32.mrf.mxu0
        %v740 = vadd.f32 %v628, %v739
        %v741 = vpop.f32.mrf.mxu0
        %742 = vmatprep.mubr.bf16.mxu0 0
        %743 = vmatmul.mubr.bf16.gmra.mxu0 %v647
        %v744 = vpop.f32.mrf.mxu0
        %v745 = vadd.f32 %v628, %v744
        %v746 = vpop.f32.mrf.mxu0
        %v747 = vpop.f32.mrf.mxu0
        %v748 = vadd.f32 %v628, %v747
        %v749 = vpop.f32.mrf.mxu0
        %750 = vmatprep.mubr.bf16.mxu0 0
        %751 = vmatmul.mubr.bf16.gmra.mxu0 %v648
        %v752 = vpop.f32.mrf.mxu0
        %v753 = vadd.f32 %v628, %v752
        %v754 = vpop.f32.mrf.mxu0
        %v755 = vpop.f32.mrf.mxu0
        %v756 = vadd.f32 %v628, %v755
        %v757 = vpop.f32.mrf.mxu0
        %758 = vmatprep.mubr.bf16.mxu0 0
        %759 = vmatmul.mubr.bf16.gmra.mxu0 %v649
        %v760 = vpop.f32.mrf.mxu0
        %v761 = vadd.f32 %v628, %v760
        %v762 = vpop.f32.mrf.mxu0
        %v763 = vpop.f32.mrf.mxu0
        %v764 = vadd.f32 %v628, %v763
        %v765 = vpop.f32.mrf.mxu0
        %766 = vdwg.mxu0
        %v767 = vld [vmem:[#allocation11] sm:$0xf]
        %v768 = vld [vmem:[#allocation11 + $0x4] sm:$0xf]
        %v769 = vld [vmem:[#allocation11 + $0x8] sm:$0xf]
        %v770 = vld [vmem:[#allocation11 + $0xc] sm:$0xf]
        %v771 = vld [vmem:[#allocation11 + $0x10] sm:$0xf]
        %v772 = vld [vmem:[#allocation11 + $0x14] sm:$0xf]
        %v773 = vld [vmem:[#allocation11 + $0x18] sm:$0xf]
        %v774 = vld [vmem:[#allocation11 + $0x1c] sm:$0xf]
        %v775 = vld [vmem:[#allocation11 + $0x20] sm:$0xf]
        %v776 = vld [vmem:[#allocation11 + $0x24] sm:$0xf]
        %v777 = vld [vmem:[#allocation11 + $0x28] sm:$0xf]
        %v778 = vld [vmem:[#allocation11 + $0x2c] sm:$0xf]
        %v779 = vld [vmem:[#allocation11 + $0x30] sm:$0xf]
        %v780 = vld [vmem:[#allocation11 + $0x34] sm:$0xf]
        %v781 = vld [vmem:[#allocation11 + $0x38] sm:$0xf]
        %v782 = vld [vmem:[#allocation11 + $0x3c] sm:$0xf]
        %v783 = vld [vmem:[%s7] sm:$0x1]
        %v785 = vlaneseq
        %v786 = vshrl.u32 %v785, 7
        %v787 = vsub.s32 0, %v786
        %v788 = vrot.slane %v783, %v787
        %v798 = vunpack.c.l.b16 %v591
        %v799 = vunpack.c.l.b16 %v592
        %v800 = vunpack.c.l.b16 %v593
        %v801 = vunpack.c.l.b16 %v594
        %v802 = vunpack.c.l.b16 %v595
        %v803 = vunpack.c.l.b16 %v596
        %v804 = vunpack.c.l.b16 %v597
        %v805 = vunpack.c.l.b16 %v598
        %v806 = vpack.c.b16 %v799, %v798
        %v807 = vpack.c.b16 %v801, %v800
        %v808 = vpack.c.b16 %v803, %v802
        %v809 = vpack.c.b16 %v805, %v804
        %v830 = vunpack.c.l.b16 %v767
        %v831 = vunpack.c.l.b16 %v768
        %v832 = vunpack.c.l.b16 %v769
        %v833 = vunpack.c.l.b16 %v770
        %v834 = vunpack.c.l.b16 %v771
        %v835 = vunpack.c.l.b16 %v772
        %v836 = vunpack.c.l.b16 %v773
        %v837 = vunpack.c.l.b16 %v774
        %v838 = vunpack.c.l.b16 %v775
        %v839 = vunpack.c.l.b16 %v776
        %v840 = vunpack.c.l.b16 %v777
        %v841 = vunpack.c.l.b16 %v778
        %v842 = vunpack.c.l.b16 %v779
        %v843 = vunpack.c.l.b16 %v780
        %v844 = vunpack.c.l.b16 %v781
        %v845 = vunpack.c.l.b16 %v782
        %v846 = vpack.c.b16 %v831, %v830
        %v847 = vpack.c.b16 %v833, %v832
        %v848 = vpack.c.b16 %v835, %v834
        %v849 = vpack.c.b16 %v837, %v836
        %v850 = vpack.c.b16 %v839, %v838
        %v851 = vpack.c.b16 %v841, %v840
        %v852 = vpack.c.b16 %v843, %v842
        %v853 = vpack.c.b16 %v845, %v844
        %862 = vmatprep.subr.bf16.mxu0 0
        %863 = vmatpush1.bf16.msra.mxu0 %v853
        %864 = vmatprep.subr.bf16.mxu0 0
        %865 = vmatpush1.bf16.msra.mxu0 %v852
        %866 = vmatprep.subr.bf16.mxu0 0
        %867 = vmatpush1.bf16.msra.mxu0 %v851
        %868 = vmatprep.subr.bf16.mxu0 0
        %869 = vmatpush1.bf16.msra.mxu0 %v850
        %870 = vmatprep.subr.bf16.mxu0 0
        %871 = vmatpush1.bf16.msra.mxu0 %v849
        %872 = vmatprep.subr.bf16.mxu0 0
        %873 = vmatpush1.bf16.msra.mxu0 %v848
        %874 = vmatprep.subr.bf16.mxu0 0
        %875 = vmatpush1.bf16.msra.mxu0 %v847
        %876 = vmatprep.subr.bf16.mxu0 0
        %877 = vmatpush1.bf16.msra.mxu0 %v846
        %878 = vmatprep.subr.bf16.mxu0 0
        %879 = vmatpush2.bf16.msra.mxu0 0
        %880 = vmatprep.subr.bf16.mxu0 0
        %881 = vmatpush2.bf16.msra.mxu0 0
        %882 = vmatprep.subr.bf16.mxu0 0
        %883 = vmatpush2.bf16.msra.mxu0 0
        %884 = vmatprep.subr.bf16.mxu0 0
        %885 = vmatpush2.bf16.msra.mxu0 0
        %886 = vmatprep.subr.bf16.mxu0 0
        %887 = vmatpush2.bf16.msra.mxu0 0
        %888 = vmatprep.subr.bf16.mxu0 0
        %889 = vmatpush2.bf16.msra.mxu0 0
        %890 = vmatprep.subr.bf16.mxu0 0
        %891 = vmatpush2.bf16.msra.mxu0 0
        %892 = vmatprep.subr.bf16.mxu0 0
        %893 = vmatpush2.bf16.msra.mxu0 0
        %894 = vmatprep.mubr.bf16.mxu0 0
        %895 = vmatmul.mubr.bf16.gmra.mxu0 %v806
        %v896 = vpop.f32.mrf.mxu0
        %v897 = vadd.f32 %v788, %v896
        %v898 = vpop.f32.mrf.mxu0
        %v899 = vpop.f32.mrf.mxu0
        %v900 = vadd.f32 %v788, %v899
        %v901 = vpop.f32.mrf.mxu0
        %902 = vmatprep.mubr.bf16.mxu0 0
        %903 = vmatmul.mubr.bf16.gmra.mxu0 %v807
        %v904 = vpop.f32.mrf.mxu0
        %v905 = vadd.f32 %v788, %v904
        %v906 = vpop.f32.mrf.mxu0
        %v907 = vpop.f32.mrf.mxu0
        %v908 = vadd.f32 %v788, %v907
        %v909 = vpop.f32.mrf.mxu0
        %910 = vmatprep.mubr.bf16.mxu0 0
        %911 = vmatmul.mubr.bf16.gmra.mxu0 %v808
        %v912 = vpop.f32.mrf.mxu0
        %v913 = vadd.f32 %v788, %v912
        %v914 = vpop.f32.mrf.mxu0
        %v915 = vpop.f32.mrf.mxu0
        %v916 = vadd.f32 %v788, %v915
        %v917 = vpop.f32.mrf.mxu0
        %918 = vmatprep.mubr.bf16.mxu0 0
        %919 = vmatmul.mubr.bf16.gmra.mxu0 %v809
        %v920 = vpop.f32.mrf.mxu0
        %v921 = vadd.f32 %v788, %v920
        %v922 = vpop.f32.mrf.mxu0
        %v923 = vpop.f32.mrf.mxu0
        %v924 = vadd.f32 %v788, %v923
        %v925 = vpop.f32.mrf.mxu0
        %926 = vdwg.mxu0
        %v927 = vld [vmem:[#allocation13] sm:$0xf]
        %v928 = vld [vmem:[#allocation13 + $0x4] sm:$0xf]
        %v929 = vld [vmem:[#allocation13 + $0x8] sm:$0xf]
        %v930 = vld [vmem:[#allocation13 + $0xc] sm:$0xf]
        %v931 = vld [vmem:[#allocation13 + $0x10] sm:$0xf]
        %v932 = vld [vmem:[#allocation13 + $0x14] sm:$0xf]
        %v933 = vld [vmem:[#allocation13 + $0x18] sm:$0xf]
        %v934 = vld [vmem:[#allocation13 + $0x1c] sm:$0xf]
        %v935 = vld [vmem:[#allocation13 + $0x20] sm:$0xf]
        %v936 = vld [vmem:[#allocation13 + $0x24] sm:$0xf]
        %v937 = vld [vmem:[#allocation13 + $0x28] sm:$0xf]
        %v938 = vld [vmem:[#allocation13 + $0x2c] sm:$0xf]
        %v939 = vld [vmem:[#allocation13 + $0x30] sm:$0xf]
        %v940 = vld [vmem:[#allocation13 + $0x34] sm:$0xf]
        %v941 = vld [vmem:[#allocation13 + $0x38] sm:$0xf]
        %v942 = vld [vmem:[#allocation13 + $0x3c] sm:$0xf]
        %v943 = vld [vmem:[%s9] sm:$0x1]
        %v945 = vlaneseq
        %v946 = vshrl.u32 %v945, 7
        %v947 = vsub.s32 0, %v946
        %v948 = vrot.slane %v943, %v947
        %v958 = vunpack.c.l.b16 %v599
        %v959 = vunpack.c.l.b16 %v600
        %v960 = vunpack.c.l.b16 %v601
        %v961 = vunpack.c.l.b16 %v602
        %v962 = vunpack.c.l.b16 %v603
        %v963 = vunpack.c.l.b16 %v604
        %v964 = vunpack.c.l.b16 %v605
        %v965 = vunpack.c.l.b16 %v606
        %v966 = vpack.c.b16 %v959, %v958
        %v967 = vpack.c.b16 %v961, %v960
        %v968 = vpack.c.b16 %v963, %v962
        %v969 = vpack.c.b16 %v965, %v964
        %v990 = vunpack.c.l.b16 %v927
        %v991 = vunpack.c.l.b16 %v928
        %v992 = vunpack.c.l.b16 %v929
        %v993 = vunpack.c.l.b16 %v930
        %v994 = vunpack.c.l.b16 %v931
        %v995 = vunpack.c.l.b16 %v932
        %v996 = vunpack.c.l.b16 %v933
        %v997 = vunpack.c.l.b16 %v934
        %v998 = vunpack.c.l.b16 %v935
        %v999 = vunpack.c.l.b16 %v936
        %v1000 = vunpack.c.l.b16 %v937
        %v1001 = vunpack.c.l.b16 %v938
        %v1002 = vunpack.c.l.b16 %v939
        %v1003 = vunpack.c.l.b16 %v940
        %v1004 = vunpack.c.l.b16 %v941
        %v1005 = vunpack.c.l.b16 %v942
        %v1006 = vpack.c.b16 %v991, %v990
        %v1007 = vpack.c.b16 %v993, %v992
        %v1008 = vpack.c.b16 %v995, %v994
        %v1009 = vpack.c.b16 %v997, %v996
        %v1010 = vpack.c.b16 %v999, %v998
        %v1011 = vpack.c.b16 %v1001, %v1000
        %v1012 = vpack.c.b16 %v1003, %v1002
        %v1013 = vpack.c.b16 %v1005, %v1004
        %1022 = vmatprep.subr.bf16.mxu0 0
        %1023 = vmatpush1.bf16.msra.mxu0 %v1013
        %1024 = vmatprep.subr.bf16.mxu0 0
        %1025 = vmatpush1.bf16.msra.mxu0 %v1012
        %1026 = vmatprep.subr.bf16.mxu0 0
        %1027 = vmatpush1.bf16.msra.mxu0 %v1011
        %1028 = vmatprep.subr.bf16.mxu0 0
        %1029 = vmatpush1.bf16.msra.mxu0 %v1010
        %1030 = vmatprep.subr.bf16.mxu0 0
        %1031 = vmatpush1.bf16.msra.mxu0 %v1009
        %1032 = vmatprep.subr.bf16.mxu0 0
        %1033 = vmatpush1.bf16.msra.mxu0 %v1008
        %1034 = vmatprep.subr.bf16.mxu0 0
        %1035 = vmatpush1.bf16.msra.mxu0 %v1007
        %1036 = vmatprep.subr.bf16.mxu0 0
        %1037 = vmatpush1.bf16.msra.mxu0 %v1006
        %1038 = vmatprep.subr.bf16.mxu0 0
        %1039 = vmatpush2.bf16.msra.mxu0 0
        %1040 = vmatprep.subr.bf16.mxu0 0
        %1041 = vmatpush2.bf16.msra.mxu0 0
        %1042 = vmatprep.subr.bf16.mxu0 0
        %1043 = vmatpush2.bf16.msra.mxu0 0
        %1044 = vmatprep.subr.bf16.mxu0 0
        %1045 = vmatpush2.bf16.msra.mxu0 0
        %1046 = vmatprep.subr.bf16.mxu0 0
        %1047 = vmatpush2.bf16.msra.mxu0 0
        %1048 = vmatprep.subr.bf16.mxu0 0
        %1049 = vmatpush2.bf16.msra.mxu0 0
        %1050 = vmatprep.subr.bf16.mxu0 0
        %1051 = vmatpush2.bf16.msra.mxu0 0
        %1052 = vmatprep.subr.bf16.mxu0 0
        %1053 = vmatpush2.bf16.msra.mxu0 0
        %1054 = vmatprep.mubr.bf16.mxu0 0
        %1055 = vmatmul.mubr.bf16.gmra.mxu0 %v966
        %v1056 = vpop.f32.mrf.mxu0
        %v1057 = vadd.f32 %v948, %v1056
        %v1058 = vpop.f32.mrf.mxu0
        %v1059 = vpop.f32.mrf.mxu0
        %v1060 = vadd.f32 %v948, %v1059
        %v1061 = vpop.f32.mrf.mxu0
        %1062 = vmatprep.mubr.bf16.mxu0 0
        %1063 = vmatmul.mubr.bf16.gmra.mxu0 %v967
        %v1064 = vpop.f32.mrf.mxu0
        %v1065 = vadd.f32 %v948, %v1064
        %v1066 = vpop.f32.mrf.mxu0
        %v1067 = vpop.f32.mrf.mxu0
        %v1068 = vadd.f32 %v948, %v1067
        %v1069 = vpop.f32.mrf.mxu0
        %1070 = vmatprep.mubr.bf16.mxu0 0
        %1071 = vmatmul.mubr.bf16.gmra.mxu0 %v968
        %v1072 = vpop.f32.mrf.mxu0
        %v1073 = vadd.f32 %v948, %v1072
        %v1074 = vpop.f32.mrf.mxu0
        %v1075 = vpop.f32.mrf.mxu0
        %v1076 = vadd.f32 %v948, %v1075
        %v1077 = vpop.f32.mrf.mxu0
        %1078 = vmatprep.mubr.bf16.mxu0 0
        %1079 = vmatmul.mubr.bf16.gmra.mxu0 %v969
        %v1080 = vpop.f32.mrf.mxu0
        %v1081 = vadd.f32 %v948, %v1080
        %v1082 = vpop.f32.mrf.mxu0
        %v1083 = vpop.f32.mrf.mxu0
        %v1084 = vadd.f32 %v948, %v1083
        %v1085 = vpop.f32.mrf.mxu0
        %1086 = vdwg.mxu0
        %v1087 = vmul.f32 %v737, 0.17677669
        %v1088 = vmul.f32 %v740, 0.17677669
        %v1089 = vmul.f32 %v745, 0.17677669
        %v1090 = vmul.f32 %v748, 0.17677669
        %v1091 = vmul.f32 %v753, 0.17677669
        %v1092 = vmul.f32 %v756, 0.17677669
        %v1093 = vmul.f32 %v761, 0.17677669
        %v1094 = vmul.f32 %v764, 0.17677669
        %v1095 = vpack.c.bf16 %v1088, %v1087
        %v1096 = vpack.c.bf16 %v1090, %v1089
        %v1097 = vpack.c.bf16 %v1092, %v1091
        %v1098 = vpack.c.bf16 %v1094, %v1093
        %1103 = vrot.lane.b32.xlu0 %v1095, 96
        %v1104 = vpop.permute.xlu0 %1103
        %1105 = vrot.lane.b32.xlu0 %v1096, 96
        %v1106 = vpop.permute.xlu0 %1105
        %1107 = vrot.lane.b32.xlu0 %v1097, 96
        %v1108 = vpop.permute.xlu0 %1107
        %1109 = vrot.lane.b32.xlu0 %v1098, 96
        %v1110 = vpop.permute.xlu0 %1109
        %1111 = vrot.lane.b32.xlu0 %v1095, 64
        %v1112 = vpop.permute.xlu0 %1111
        %1113 = vrot.lane.b32.xlu0 %v1096, 64
        %v1114 = vpop.permute.xlu0 %1113
        %1115 = vrot.lane.b32.xlu0 %v1097, 64
        %v1116 = vpop.permute.xlu0 %1115
        %1117 = vrot.lane.b32.xlu0 %v1098, 64
        %v1118 = vpop.permute.xlu0 %1117
        %1119 = vrot.lane.b32.xlu0 %v1095, 32
        %v1120 = vpop.permute.xlu0 %1119
        %1121 = vrot.lane.b32.xlu0 %v1096, 32
        %v1122 = vpop.permute.xlu0 %1121
        %1123 = vrot.lane.b32.xlu0 %v1097, 32
        %v1124 = vpop.permute.xlu0 %1123
        %1125 = vrot.lane.b32.xlu0 %v1098, 32
        %v1126 = vpop.permute.xlu0 %1125
        %v1127 = vpack.c.bf16 %v900, %v897
        %v1128 = vpack.c.bf16 %v908, %v905
        %v1129 = vpack.c.bf16 %v916, %v913
        %v1130 = vpack.c.bf16 %v924, %v921
        %1135 = vrot.lane.b32.xlu0 %v1127, 96
        %v1136 = vpop.permute.xlu0 %1135
        %1137 = vrot.lane.b32.xlu0 %v1128, 96
        %v1138 = vpop.permute.xlu0 %1137
        %1139 = vrot.lane.b32.xlu0 %v1129, 96
        %v1140 = vpop.permute.xlu0 %1139
        %1141 = vrot.lane.b32.xlu0 %v1130, 96
        %v1142 = vpop.permute.xlu0 %1141
        %1143 = vrot.lane.b32.xlu0 %v1127, 64
        %v1144 = vpop.permute.xlu0 %1143
        %1145 = vrot.lane.b32.xlu0 %v1128, 64
        %v1146 = vpop.permute.xlu0 %1145
        %1147 = vrot.lane.b32.xlu0 %v1129, 64
        %v1148 = vpop.permute.xlu0 %1147
        %1149 = vrot.lane.b32.xlu0 %v1130, 64
        %v1150 = vpop.permute.xlu0 %1149
        %1151 = vrot.lane.b32.xlu0 %v1127, 32
        %v1152 = vpop.permute.xlu0 %1151
        %1153 = vrot.lane.b32.xlu0 %v1128, 32
        %v1154 = vpop.permute.xlu0 %1153
        %1155 = vrot.lane.b32.xlu0 %v1129, 32
        %v1156 = vpop.permute.xlu0 %1155
        %1157 = vrot.lane.b32.xlu0 %v1130, 32
        %v1158 = vpop.permute.xlu0 %1157
        %v1159 = vpack.c.bf16 %v1060, %v1057
        %v1160 = vpack.c.bf16 %v1068, %v1065
        %v1161 = vpack.c.bf16 %v1076, %v1073
        %v1162 = vpack.c.bf16 %v1084, %v1081
        %1167 = vrot.lane.b32.xlu0 %v1159, 96
        %v1168 = vpop.permute.xlu0 %1167
        %1169 = vrot.lane.b32.xlu0 %v1160, 96
        %v1170 = vpop.permute.xlu0 %1169
        %1171 = vrot.lane.b32.xlu0 %v1161, 96
        %v1172 = vpop.permute.xlu0 %1171
        %1173 = vrot.lane.b32.xlu0 %v1162, 96
        %v1174 = vpop.permute.xlu0 %1173
        %1179 = vrot.lane.b32.xlu0 %v1159, 64
        %v1180 = vpop.permute.xlu0 %1179
        %1181 = vrot.lane.b32.xlu0 %v1160, 64
        %v1182 = vpop.permute.xlu0 %1181
        %1183 = vrot.lane.b32.xlu0 %v1161, 64
        %v1184 = vpop.permute.xlu0 %1183
        %1185 = vrot.lane.b32.xlu0 %v1162, 64
        %v1186 = vpop.permute.xlu0 %1185
        %1191 = vrot.lane.b32.xlu0 %v1159, 32
        %v1192 = vpop.permute.xlu0 %1191
        %1193 = vrot.lane.b32.xlu0 %v1160, 32
        %v1194 = vpop.permute.xlu0 %1193
        %1195 = vrot.lane.b32.xlu0 %v1161, 32
        %v1196 = vpop.permute.xlu0 %1195
        %1197 = vrot.lane.b32.xlu0 %v1162, 32
        %v1198 = vpop.permute.xlu0 %1197
        %vm1203 = vcmask 261120
        %v1205 = vsel %vm1203, %v1095, 0
        %v1208 = vsel %vm1203, %v1096, 0
        %v1211 = vsel %vm1203, %v1097, 0
        %v1214 = vsel %vm1203, %v1098, 0
        %v1217 = vsel %vm1203, %v1127, 0
        %v1220 = vsel %vm1203, %v1128, 0
        %v1223 = vsel %vm1203, %v1129, 0
        %v1226 = vsel %vm1203, %v1130, 0
        %1228 = vmatprep.subr.bf16.mxu0 0
        %1229 = vmatpush1.bf16.xpose.msra.mxu0 0
        %1230 = vmatprep.subr.bf16.mxu0 0
        %1231 = vmatpush1.bf16.xpose.msra.mxu0 0
        %1232 = vmatprep.subr.bf16.mxu0 0
        %1233 = vmatpush1.bf16.xpose.msra.mxu0 0
        %1234 = vmatprep.subr.bf16.mxu0 0
        %1235 = vmatpush1.bf16.xpose.msra.mxu0 0
        %1236 = vmatprep.subr.bf16.mxu0 0
        %1237 = vmatpush1.bf16.xpose.msra.mxu0 %v1226
        %1238 = vmatprep.subr.bf16.mxu0 0
        %1239 = vmatpush1.bf16.xpose.msra.mxu0 %v1223
        %1240 = vmatprep.subr.bf16.mxu0 0
        %1241 = vmatpush1.bf16.xpose.msra.mxu0 %v1220
        %1242 = vmatprep.subr.bf16.mxu0 0
        %1243 = vmatpush1.bf16.xpose.msra.mxu0 %v1217
        %1244 = vmatprep.subr.bf16.mxu0 0
        %1245 = vmatpush2.bf16.xpose.msra.mxu0 0
        %1246 = vmatprep.subr.bf16.mxu0 0
        %1247 = vmatpush2.bf16.xpose.msra.mxu0 0
        %1248 = vmatprep.subr.bf16.mxu0 0
        %1249 = vmatpush2.bf16.xpose.msra.mxu0 0
        %1250 = vmatprep.subr.bf16.mxu0 0
        %1251 = vmatpush2.bf16.xpose.msra.mxu0 0
        %1252 = vmatprep.subr.bf16.mxu0 0
        %1253 = vmatpush2.bf16.xpose.msra.mxu0 0
        %1254 = vmatprep.subr.bf16.mxu0 0
        %1255 = vmatpush2.bf16.xpose.msra.mxu0 0
        %1256 = vmatprep.subr.bf16.mxu0 0
        %1257 = vmatpush2.bf16.xpose.msra.mxu0 0
        %1258 = vmatprep.subr.bf16.mxu0 0
        %1259 = vmatpush2.bf16.xpose.msra.mxu0 0
        %1260 = vmatprep.mubr.bf16.mxu0 0
        %1261 = vmatmul.mubr.bf16.gmra.mxu0 %v1205
        %v1262 = vpop.f32.mrf.mxu0
        %v1263 = vadd.f32 0.0, %v1262
        %v1264 = vpop.f32.mrf.mxu0
        %v1265 = vpop.f32.mrf.mxu0
        %v1266 = vadd.f32 0.0, %v1265
        %v1267 = vpop.f32.mrf.mxu0
        %1268 = vmatprep.mubr.bf16.mxu0 0
        %1269 = vmatmul.mubr.bf16.gmra.mxu0 %v1208
        %v1270 = vpop.f32.mrf.mxu0
        %v1271 = vadd.f32 0.0, %v1270
        %v1272 = vpop.f32.mrf.mxu0
        %v1273 = vpop.f32.mrf.mxu0
        %v1274 = vadd.f32 0.0, %v1273
        %v1275 = vpop.f32.mrf.mxu0
        %1276 = vmatprep.mubr.bf16.mxu0 0
        %1277 = vmatmul.mubr.bf16.gmra.mxu0 %v1211
        %v1278 = vpop.f32.mrf.mxu0
        %v1279 = vadd.f32 0.0, %v1278
        %v1280 = vpop.f32.mrf.mxu0
        %v1281 = vpop.f32.mrf.mxu0
        %v1282 = vadd.f32 0.0, %v1281
        %v1283 = vpop.f32.mrf.mxu0
        %1284 = vmatprep.mubr.bf16.mxu0 0
        %1285 = vmatmul.mubr.bf16.gmra.mxu0 %v1214
        %v1286 = vpop.f32.mrf.mxu0
        %v1287 = vadd.f32 0.0, %v1286
        %v1288 = vpop.f32.mrf.mxu0
        %v1289 = vpop.f32.mrf.mxu0
        %v1290 = vadd.f32 0.0, %v1289
        %v1291 = vpop.f32.mrf.mxu0
        %1292 = vdwg.mxu0
        %v1294 = vsel %vm1203, %v1104, 0
        %v1297 = vsel %vm1203, %v1106, 0
        %v1300 = vsel %vm1203, %v1108, 0
        %v1303 = vsel %vm1203, %v1110, 0
        %v1306 = vsel %vm1203, %v1136, 0
        %v1309 = vsel %vm1203, %v1138, 0
        %v1312 = vsel %vm1203, %v1140, 0
        %v1315 = vsel %vm1203, %v1142, 0
        %1317 = vmatprep.subr.bf16.mxu0 0
        %1318 = vmatpush1.bf16.xpose.msra.mxu0 0
        %1319 = vmatprep.subr.bf16.mxu0 0
        %1320 = vmatpush1.bf16.xpose.msra.mxu0 0
        %1321 = vmatprep.subr.bf16.mxu0 0
        %1322 = vmatpush1.bf16.xpose.msra.mxu0 0
        %1323 = vmatprep.subr.bf16.mxu0 0
        %1324 = vmatpush1.bf16.xpose.msra.mxu0 0
        %1325 = vmatprep.subr.bf16.mxu0 0
        %1326 = vmatpush1.bf16.xpose.msra.mxu0 %v1315
        %1327 = vmatprep.subr.bf16.mxu0 0
        %1328 = vmatpush1.bf16.xpose.msra.mxu0 %v1312
        %1329 = vmatprep.subr.bf16.mxu0 0
        %1330 = vmatpush1.bf16.xpose.msra.mxu0 %v1309
        %1331 = vmatprep.subr.bf16.mxu0 0
        %1332 = vmatpush1.bf16.xpose.msra.mxu0 %v1306
        %1333 = vmatprep.subr.bf16.mxu0 0
        %1334 = vmatpush2.bf16.xpose.msra.mxu0 0
        %1335 = vmatprep.subr.bf16.mxu0 0
        %1336 = vmatpush2.bf16.xpose.msra.mxu0 0
        %1337 = vmatprep.subr.bf16.mxu0 0
        %1338 = vmatpush2.bf16.xpose.msra.mxu0 0
        %1339 = vmatprep.subr.bf16.mxu0 0
        %1340 = vmatpush2.bf16.xpose.msra.mxu0 0
        %1341 = vmatprep.subr.bf16.mxu0 0
        %1342 = vmatpush2.bf16.xpose.msra.mxu0 0
        %1343 = vmatprep.subr.bf16.mxu0 0
        %1344 = vmatpush2.bf16.xpose.msra.mxu0 0
        %1345 = vmatprep.subr.bf16.mxu0 0
        %1346 = vmatpush2.bf16.xpose.msra.mxu0 0
        %1347 = vmatprep.subr.bf16.mxu0 0
        %1348 = vmatpush2.bf16.xpose.msra.mxu0 0
        %1349 = vmatprep.mubr.bf16.mxu0 0
        %1350 = vmatmul.mubr.bf16.gmra.mxu0 %v1294
        %v1351 = vpop.f32.mrf.mxu0
        %v1352 = vadd.f32 0.0, %v1351
        %v1353 = vpop.f32.mrf.mxu0
        %v1354 = vpop.f32.mrf.mxu0
        %v1355 = vadd.f32 0.0, %v1354
        %v1356 = vpop.f32.mrf.mxu0
        %1357 = vmatprep.mubr.bf16.mxu0 0
        %1358 = vmatmul.mubr.bf16.gmra.mxu0 %v1297
        %v1359 = vpop.f32.mrf.mxu0
        %v1360 = vadd.f32 0.0, %v1359
        %v1361 = vpop.f32.mrf.mxu0
        %v1362 = vpop.f32.mrf.mxu0
        %v1363 = vadd.f32 0.0, %v1362
        %v1364 = vpop.f32.mrf.mxu0
        %1365 = vmatprep.mubr.bf16.mxu0 0
        %1366 = vmatmul.mubr.bf16.gmra.mxu0 %v1300
        %v1367 = vpop.f32.mrf.mxu0
        %v1368 = vadd.f32 0.0, %v1367
        %v1369 = vpop.f32.mrf.mxu0
        %v1370 = vpop.f32.mrf.mxu0
        %v1371 = vadd.f32 0.0, %v1370
        %v1372 = vpop.f32.mrf.mxu0
        %1373 = vmatprep.mubr.bf16.mxu0 0
        %1374 = vmatmul.mubr.bf16.gmra.mxu0 %v1303
        %v1375 = vpop.f32.mrf.mxu0
        %v1376 = vadd.f32 0.0, %v1375
        %v1377 = vpop.f32.mrf.mxu0
        %v1378 = vpop.f32.mrf.mxu0
        %v1379 = vadd.f32 0.0, %v1378
        %v1380 = vpop.f32.mrf.mxu0
        %1381 = vdwg.mxu0
        %v1383 = vsel %vm1203, %v1112, 0
        %v1386 = vsel %vm1203, %v1114, 0
        %v1389 = vsel %vm1203, %v1116, 0
        %v1392 = vsel %vm1203, %v1118, 0
        %v1395 = vsel %vm1203, %v1144, 0
        %v1398 = vsel %vm1203, %v1146, 0
        %v1401 = vsel %vm1203, %v1148, 0
        %v1404 = vsel %vm1203, %v1150, 0
        %1406 = vmatprep.subr.bf16.mxu0 0
        %1407 = vmatpush1.bf16.xpose.msra.mxu0 0
        %1408 = vmatprep.subr.bf16.mxu0 0
        %1409 = vmatpush1.bf16.xpose.msra.mxu0 0
        %1410 = vmatprep.subr.bf16.mxu0 0
        %1411 = vmatpush1.bf16.xpose.msra.mxu0 0
        %1412 = vmatprep.subr.bf16.mxu0 0
        %1413 = vmatpush1.bf16.xpose.msra.mxu0 0
        %1414 = vmatprep.subr.bf16.mxu0 0
        %1415 = vmatpush1.bf16.xpose.msra.mxu0 %v1404
        %1416 = vmatprep.subr.bf16.mxu0 0
        %1417 = vmatpush1.bf16.xpose.msra.mxu0 %v1401
        %1418 = vmatprep.subr.bf16.mxu0 0
        %1419 = vmatpush1.bf16.xpose.msra.mxu0 %v1398
        %1420 = vmatprep.subr.bf16.mxu0 0
        %1421 = vmatpush1.bf16.xpose.msra.mxu0 %v1395
        %1422 = vmatprep.subr.bf16.mxu0 0
        %1423 = vmatpush2.bf16.xpose.msra.mxu0 0
        %1424 = vmatprep.subr.bf16.mxu0 0
        %1425 = vmatpush2.bf16.xpose.msra.mxu0 0
        %1426 = vmatprep.subr.bf16.mxu0 0
        %1427 = vmatpush2.bf16.xpose.msra.mxu0 0
        %1428 = vmatprep.subr.bf16.mxu0 0
        %1429 = vmatpush2.bf16.xpose.msra.mxu0 0
        %1430 = vmatprep.subr.bf16.mxu0 0
        %1431 = vmatpush2.bf16.xpose.msra.mxu0 0
        %1432 = vmatprep.subr.bf16.mxu0 0
        %1433 = vmatpush2.bf16.xpose.msra.mxu0 0
        %1434 = vmatprep.subr.bf16.mxu0 0
        %1435 = vmatpush2.bf16.xpose.msra.mxu0 0
        %1436 = vmatprep.subr.bf16.mxu0 0
        %1437 = vmatpush2.bf16.xpose.msra.mxu0 0
        %1438 = vmatprep.mubr.bf16.mxu0 0
        %1439 = vmatmul.mubr.bf16.gmra.mxu0 %v1383
        %v1440 = vpop.f32.mrf.mxu0
        %v1441 = vadd.f32 0.0, %v1440
        %v1442 = vpop.f32.mrf.mxu0
        %v1443 = vpop.f32.mrf.mxu0
        %v1444 = vadd.f32 0.0, %v1443
        %v1445 = vpop.f32.mrf.mxu0
        %1446 = vmatprep.mubr.bf16.mxu0 0
        %1447 = vmatmul.mubr.bf16.gmra.mxu0 %v1386
        %v1448 = vpop.f32.mrf.mxu0
        %v1449 = vadd.f32 0.0, %v1448
        %v1450 = vpop.f32.mrf.mxu0
        %v1451 = vpop.f32.mrf.mxu0
        %v1452 = vadd.f32 0.0, %v1451
        %v1453 = vpop.f32.mrf.mxu0
        %1454 = vmatprep.mubr.bf16.mxu0 0
        %1455 = vmatmul.mubr.bf16.gmra.mxu0 %v1389
        %v1456 = vpop.f32.mrf.mxu0
        %v1457 = vadd.f32 0.0, %v1456
        %v1458 = vpop.f32.mrf.mxu0
        %v1459 = vpop.f32.mrf.mxu0
        %v1460 = vadd.f32 0.0, %v1459
        %v1461 = vpop.f32.mrf.mxu0
        %1462 = vmatprep.mubr.bf16.mxu0 0
        %1463 = vmatmul.mubr.bf16.gmra.mxu0 %v1392
        %v1464 = vpop.f32.mrf.mxu0
        %v1465 = vadd.f32 0.0, %v1464
        %v1466 = vpop.f32.mrf.mxu0
        %v1467 = vpop.f32.mrf.mxu0
        %v1468 = vadd.f32 0.0, %v1467
        %v1469 = vpop.f32.mrf.mxu0
        %1470 = vdwg.mxu0
        %v1472 = vsel %vm1203, %v1120, 0
        %v1475 = vsel %vm1203, %v1122, 0
        %v1478 = vsel %vm1203, %v1124, 0
        %v1481 = vsel %vm1203, %v1126, 0
        %v1484 = vsel %vm1203, %v1152, 0
        %v1487 = vsel %vm1203, %v1154, 0
        %v1490 = vsel %vm1203, %v1156, 0
        %v1493 = vsel %vm1203, %v1158, 0
        %1495 = vmatprep.subr.bf16.mxu0 0
        %1496 = vmatpush1.bf16.xpose.msra.mxu0 0
        %1497 = vmatprep.subr.bf16.mxu0 0
        %1498 = vmatpush1.bf16.xpose.msra.mxu0 0
        %1499 = vmatprep.subr.bf16.mxu0 0
        %1500 = vmatpush1.bf16.xpose.msra.mxu0 0
        %1501 = vmatprep.subr.bf16.mxu0 0
        %1502 = vmatpush1.bf16.xpose.msra.mxu0 0
        %1503 = vmatprep.subr.bf16.mxu0 0
        %1504 = vmatpush1.bf16.xpose.msra.mxu0 %v1493
        %1505 = vmatprep.subr.bf16.mxu0 0
        %1506 = vmatpush1.bf16.xpose.msra.mxu0 %v1490
        %1507 = vmatprep.subr.bf16.mxu0 0
        %1508 = vmatpush1.bf16.xpose.msra.mxu0 %v1487
        %1509 = vmatprep.subr.bf16.mxu0 0
        %1510 = vmatpush1.bf16.xpose.msra.mxu0 %v1484
        %1511 = vmatprep.subr.bf16.mxu0 0
        %1512 = vmatpush2.bf16.xpose.msra.mxu0 0
        %1513 = vmatprep.subr.bf16.mxu0 0
        %1514 = vmatpush2.bf16.xpose.msra.mxu0 0
        %1515 = vmatprep.subr.bf16.mxu0 0
        %1516 = vmatpush2.bf16.xpose.msra.mxu0 0
        %1517 = vmatprep.subr.bf16.mxu0 0
        %1518 = vmatpush2.bf16.xpose.msra.mxu0 0
        %1519 = vmatprep.subr.bf16.mxu0 0
        %1520 = vmatpush2.bf16.xpose.msra.mxu0 0
        %1521 = vmatprep.subr.bf16.mxu0 0
        %1522 = vmatpush2.bf16.xpose.msra.mxu0 0
        %1523 = vmatprep.subr.bf16.mxu0 0
        %1524 = vmatpush2.bf16.xpose.msra.mxu0 0
        %1525 = vmatprep.subr.bf16.mxu0 0
        %1526 = vmatpush2.bf16.xpose.msra.mxu0 0
        %1527 = vmatprep.mubr.bf16.mxu0 0
        %1528 = vmatmul.mubr.bf16.gmra.mxu0 %v1472
        %v1529 = vpop.f32.mrf.mxu0
        %v1530 = vadd.f32 0.0, %v1529
        %v1531 = vpop.f32.mrf.mxu0
        %v1532 = vpop.f32.mrf.mxu0
        %v1533 = vadd.f32 0.0, %v1532
        %v1534 = vpop.f32.mrf.mxu0
        %1535 = vmatprep.mubr.bf16.mxu0 0
        %1536 = vmatmul.mubr.bf16.gmra.mxu0 %v1475
        %v1537 = vpop.f32.mrf.mxu0
        %v1538 = vadd.f32 0.0, %v1537
        %v1539 = vpop.f32.mrf.mxu0
        %v1540 = vpop.f32.mrf.mxu0
        %v1541 = vadd.f32 0.0, %v1540
        %v1542 = vpop.f32.mrf.mxu0
        %1543 = vmatprep.mubr.bf16.mxu0 0
        %1544 = vmatmul.mubr.bf16.gmra.mxu0 %v1478
        %v1545 = vpop.f32.mrf.mxu0
        %v1546 = vadd.f32 0.0, %v1545
        %v1547 = vpop.f32.mrf.mxu0
        %v1548 = vpop.f32.mrf.mxu0
        %v1549 = vadd.f32 0.0, %v1548
        %v1550 = vpop.f32.mrf.mxu0
        %1551 = vmatprep.mubr.bf16.mxu0 0
        %1552 = vmatmul.mubr.bf16.gmra.mxu0 %v1481
        %v1553 = vpop.f32.mrf.mxu0
        %v1554 = vadd.f32 0.0, %v1553
        %v1555 = vpop.f32.mrf.mxu0
        %v1556 = vpop.f32.mrf.mxu0
        %v1557 = vadd.f32 0.0, %v1556
        %v1558 = vpop.f32.mrf.mxu0
        %1559 = vdwg.mxu0
        %v1560 = vld [vmem:[#allocation8] sm:$0xff]
        %v1561 = vld [vmem:[#allocation8 + $0x8] sm:$0xff]
        %v1562 = vld [vmem:[#allocation8 + $0x10] sm:$0xff]
        %v1563 = vld [vmem:[#allocation8 + $0x18] sm:$0xff]
        %v1564 = vld [vmem:[#allocation8 + $0x20] sm:$0xff]
        %v1565 = vld [vmem:[#allocation8 + $0x28] sm:$0xff]
        %v1566 = vld [vmem:[#allocation8 + $0x30] sm:$0xff]
        %v1567 = vld [vmem:[#allocation8 + $0x38] sm:$0xff]
        %vm1568 = vcmp.eq.f32.partialorder %v1560, 0.0
        %vm1569 = vcmp.eq.f32.partialorder %v1561, 0.0
        %vm1570 = vcmp.eq.f32.partialorder %v1562, 0.0
        %vm1571 = vcmp.eq.f32.partialorder %v1563, 0.0
        %vm1572 = vcmp.eq.f32.partialorder %v1564, 0.0
        %vm1573 = vcmp.eq.f32.partialorder %v1565, 0.0
        %vm1574 = vcmp.eq.f32.partialorder %v1566, 0.0
        %vm1575 = vcmp.eq.f32.partialorder %v1567, 0.0
        %v1576 = vsel %vm1568, 1, 0
        %v1577 = vsel %vm1569, 1, 0
        %v1578 = vsel %vm1570, 1, 0
        %v1579 = vsel %vm1571, 1, 0
        %v1580 = vsel %vm1572, 1, 0
        %v1581 = vsel %vm1573, 1, 0
        %v1582 = vsel %vm1574, 1, 0
        %v1583 = vsel %vm1575, 1, 0
        %vm1584 = vcmp.eq.s32.totalorder %v1576, 1
        %vm1585 = vcmp.eq.s32.totalorder %v1577, 1
        %vm1586 = vcmp.eq.s32.totalorder %v1578, 1
        %vm1587 = vcmp.eq.s32.totalorder %v1579, 1
        %vm1588 = vcmp.eq.s32.totalorder %v1580, 1
        %vm1589 = vcmp.eq.s32.totalorder %v1581, 1
        %vm1590 = vcmp.eq.s32.totalorder %v1582, 1
        %vm1591 = vcmp.eq.s32.totalorder %v1583, 1
        %v1592 = vsel %vm1584, -1e+09, %v1263
        %v1593 = vsel %vm1585, -1e+09, %v1266
        %v1594 = vsel %vm1586, -1e+09, %v1271
        %v1595 = vsel %vm1587, -1e+09, %v1274
        %v1596 = vsel %vm1588, -1e+09, %v1279
        %v1597 = vsel %vm1589, -1e+09, %v1282
        %v1598 = vsel %vm1590, -1e+09, %v1287
        %v1599 = vsel %vm1591, -1e+09, %v1290
        %v1600 = vsel %vm1584, -1e+09, %v1352
        %v1601 = vsel %vm1585, -1e+09, %v1355
        %v1602 = vsel %vm1586, -1e+09, %v1360
        %v1603 = vsel %vm1587, -1e+09, %v1363
        %v1604 = vsel %vm1588, -1e+09, %v1368
        %v1605 = vsel %vm1589, -1e+09, %v1371
        %v1606 = vsel %vm1590, -1e+09, %v1376
        %v1607 = vsel %vm1591, -1e+09, %v1379
        %v1608 = vsel %vm1584, -1e+09, %v1441
        %v1609 = vsel %vm1585, -1e+09, %v1444
        %v1610 = vsel %vm1586, -1e+09, %v1449
        %v1611 = vsel %vm1587, -1e+09, %v1452
        %v1612 = vsel %vm1588, -1e+09, %v1457
        %v1613 = vsel %vm1589, -1e+09, %v1460
        %v1614 = vsel %vm1590, -1e+09, %v1465
        %v1615 = vsel %vm1591, -1e+09, %v1468
        %v1616 = vsel %vm1584, -1e+09, %v1530
        %v1617 = vsel %vm1585, -1e+09, %v1533
        %v1618 = vsel %vm1586, -1e+09, %v1538
        %v1619 = vsel %vm1587, -1e+09, %v1541
        %v1620 = vsel %vm1588, -1e+09, %v1546
        %v1621 = vsel %vm1589, -1e+09, %v1549
        %v1622 = vsel %vm1590, -1e+09, %v1554
        %v1623 = vsel %vm1591, -1e+09, %v1557
        %vm1624 = vcmask 523264
        %v1625 = vsel %vm1624, %v1592, -inf
        %1626 = vmax.xlane.f32.xlu0 %v1625
        %v1627 = vpop.xlane.xlu0 %1626
        %v1628 = vsel %vm1624, %v1593, -inf
        %1629 = vmax.xlane.f32.xlu0 %v1628
        %v1630 = vpop.xlane.xlu0 %1629
        %v1631 = vsel %vm1624, %v1594, -inf
        %1632 = vmax.xlane.f32.xlu0 %v1631
        %v1633 = vpop.xlane.xlu0 %1632
        %v1634 = vsel %vm1624, %v1595, -inf
        %1635 = vmax.xlane.f32.xlu0 %v1634
        %v1636 = vpop.xlane.xlu0 %1635
        %v1637 = vsel %vm1624, %v1596, -inf
        %1638 = vmax.xlane.f32.xlu0 %v1637
        %v1639 = vpop.xlane.xlu0 %1638
        %v1640 = vsel %vm1624, %v1597, -inf
        %1641 = vmax.xlane.f32.xlu0 %v1640
        %v1642 = vpop.xlane.xlu0 %1641
        %v1643 = vsel %vm1624, %v1598, -inf
        %1644 = vmax.xlane.f32.xlu0 %v1643
        %v1645 = vpop.xlane.xlu0 %1644
        %v1646 = vsel %vm1624, %v1599, -inf
        %1647 = vmax.xlane.f32.xlu0 %v1646
        %v1648 = vpop.xlane.xlu0 %1647
        %v1649 = vsel %vm1624, %v1600, -inf
        %1650 = vmax.xlane.f32.xlu0 %v1649
        %v1651 = vpop.xlane.xlu0 %1650
        %v1652 = vsel %vm1624, %v1601, -inf
        %1653 = vmax.xlane.f32.xlu0 %v1652
        %v1654 = vpop.xlane.xlu0 %1653
        %v1655 = vsel %vm1624, %v1602, -inf
        %1656 = vmax.xlane.f32.xlu0 %v1655
        %v1657 = vpop.xlane.xlu0 %1656
        %v1658 = vsel %vm1624, %v1603, -inf
        %1659 = vmax.xlane.f32.xlu0 %v1658
        %v1660 = vpop.xlane.xlu0 %1659
        %v1661 = vsel %vm1624, %v1604, -inf
        %1662 = vmax.xlane.f32.xlu0 %v1661
        %v1663 = vpop.xlane.xlu0 %1662
        %v1664 = vsel %vm1624, %v1605, -inf
        %1665 = vmax.xlane.f32.xlu0 %v1664
        %v1666 = vpop.xlane.xlu0 %1665
        %v1667 = vsel %vm1624, %v1606, -inf
        %1668 = vmax.xlane.f32.xlu0 %v1667
        %v1669 = vpop.xlane.xlu0 %1668
        %v1670 = vsel %vm1624, %v1607, -inf
        %1671 = vmax.xlane.f32.xlu0 %v1670
        %v1672 = vpop.xlane.xlu0 %1671
        %v1673 = vsel %vm1624, %v1608, -inf
        %1674 = vmax.xlane.f32.xlu0 %v1673
        %v1675 = vpop.xlane.xlu0 %1674
        %v1676 = vsel %vm1624, %v1609, -inf
        %1677 = vmax.xlane.f32.xlu0 %v1676
        %v1678 = vpop.xlane.xlu0 %1677
        %v1679 = vsel %vm1624, %v1610, -inf
        %1680 = vmax.xlane.f32.xlu0 %v1679
        %v1681 = vpop.xlane.xlu0 %1680
        %v1682 = vsel %vm1624, %v1611, -inf
        %1683 = vmax.xlane.f32.xlu0 %v1682
        %v1684 = vpop.xlane.xlu0 %1683
        %v1685 = vsel %vm1624, %v1612, -inf
        %1686 = vmax.xlane.f32.xlu0 %v1685
        %v1687 = vpop.xlane.xlu0 %1686
        %v1688 = vsel %vm1624, %v1613, -inf
        %1689 = vmax.xlane.f32.xlu0 %v1688
        %v1690 = vpop.xlane.xlu0 %1689
        %v1691 = vsel %vm1624, %v1614, -inf
        %1692 = vmax.xlane.f32.xlu0 %v1691
        %v1693 = vpop.xlane.xlu0 %1692
        %v1694 = vsel %vm1624, %v1615, -inf
        %1695 = vmax.xlane.f32.xlu0 %v1694
        %v1696 = vpop.xlane.xlu0 %1695
        %v1697 = vsel %vm1624, %v1616, -inf
        %1698 = vmax.xlane.f32.xlu0 %v1697
        %v1699 = vpop.xlane.xlu0 %1698
        %v1700 = vsel %vm1624, %v1617, -inf
        %1701 = vmax.xlane.f32.xlu0 %v1700
        %v1702 = vpop.xlane.xlu0 %1701
        %v1703 = vsel %vm1624, %v1618, -inf
        %1704 = vmax.xlane.f32.xlu0 %v1703
        %v1705 = vpop.xlane.xlu0 %1704
        %v1706 = vsel %vm1624, %v1619, -inf
        %1707 = vmax.xlane.f32.xlu0 %v1706
        %v1708 = vpop.xlane.xlu0 %1707
        %v1709 = vsel %vm1624, %v1620, -inf
        %1710 = vmax.xlane.f32.xlu0 %v1709
        %v1711 = vpop.xlane.xlu0 %1710
        %v1712 = vsel %vm1624, %v1621, -inf
        %1713 = vmax.xlane.f32.xlu0 %v1712
        %v1714 = vpop.xlane.xlu0 %1713
        %v1715 = vsel %vm1624, %v1622, -inf
        %1716 = vmax.xlane.f32.xlu0 %v1715
        %v1717 = vpop.xlane.xlu0 %1716
        %v1718 = vsel %vm1624, %v1623, -inf
        %1719 = vmax.xlane.f32.xlu0 %v1718
        %v1720 = vpop.xlane.xlu0 %1719
        %v1721 = vsub.f32 %v1592, %v1627
        %v1722 = vsub.f32 %v1593, %v1630
        %v1723 = vsub.f32 %v1594, %v1633
        %v1724 = vsub.f32 %v1595, %v1636
        %v1725 = vsub.f32 %v1596, %v1639
        %v1726 = vsub.f32 %v1597, %v1642
        %v1727 = vsub.f32 %v1598, %v1645
        %v1728 = vsub.f32 %v1599, %v1648
        %v1729 = vsub.f32 %v1600, %v1651
        %v1730 = vsub.f32 %v1601, %v1654
        %v1731 = vsub.f32 %v1602, %v1657
        %v1732 = vsub.f32 %v1603, %v1660
        %v1733 = vsub.f32 %v1604, %v1663
        %v1734 = vsub.f32 %v1605, %v1666
        %v1735 = vsub.f32 %v1606, %v1669
        %v1736 = vsub.f32 %v1607, %v1672
        %v1737 = vsub.f32 %v1608, %v1675
        %v1738 = vsub.f32 %v1609, %v1678
        %v1739 = vsub.f32 %v1610, %v1681
        %v1740 = vsub.f32 %v1611, %v1684
        %v1741 = vsub.f32 %v1612, %v1687
        %v1742 = vsub.f32 %v1613, %v1690
        %v1743 = vsub.f32 %v1614, %v1693
        %v1744 = vsub.f32 %v1615, %v1696
        %v1745 = vsub.f32 %v1616, %v1699
        %v1746 = vsub.f32 %v1617, %v1702
        %v1747 = vsub.f32 %v1618, %v1705
        %v1748 = vsub.f32 %v1619, %v1708
        %v1749 = vsub.f32 %v1620, %v1711
        %v1750 = vsub.f32 %v1621, %v1714
        %v1751 = vsub.f32 %v1622, %v1717
        %v1752 = vsub.f32 %v1623, %v1720
        %v1753 = vmul.f32 %v1721, 1.442695
        %v1754 = vpow.pop %v1753
        %v1755 = vmul.f32 %v1722, 1.442695
        %v1756 = vpow.pop %v1755
        %v1757 = vmul.f32 %v1723, 1.442695
        %v1758 = vpow.pop %v1757
        %v1759 = vmul.f32 %v1724, 1.442695
        %v1760 = vpow.pop %v1759
        %v1761 = vmul.f32 %v1725, 1.442695
        %v1762 = vpow.pop %v1761
        %v1763 = vmul.f32 %v1726, 1.442695
        %v1764 = vpow.pop %v1763
        %v1765 = vmul.f32 %v1727, 1.442695
        %v1766 = vpow.pop %v1765
        %v1767 = vmul.f32 %v1728, 1.442695
        %v1768 = vpow.pop %v1767
        %v1769 = vmul.f32 %v1729, 1.442695
        %v1770 = vpow.pop %v1769
        %v1771 = vmul.f32 %v1730, 1.442695
        %v1772 = vpow.pop %v1771
        %v1773 = vmul.f32 %v1731, 1.442695
        %v1774 = vpow.pop %v1773
        %v1775 = vmul.f32 %v1732, 1.442695
        %v1776 = vpow.pop %v1775
        %v1777 = vmul.f32 %v1733, 1.442695
        %v1778 = vpow.pop %v1777
        %v1779 = vmul.f32 %v1734, 1.442695
        %v1780 = vpow.pop %v1779
        %v1781 = vmul.f32 %v1735, 1.442695
        %v1782 = vpow.pop %v1781
        %v1783 = vmul.f32 %v1736, 1.442695
        %v1784 = vpow.pop %v1783
        %v1785 = vmul.f32 %v1737, 1.442695
        %v1786 = vpow.pop %v1785
        %v1787 = vmul.f32 %v1738, 1.442695
        %v1788 = vpow.pop %v1787
        %v1789 = vmul.f32 %v1739, 1.442695
        %v1790 = vpow.pop %v1789
        %v1791 = vmul.f32 %v1740, 1.442695
        %v1792 = vpow.pop %v1791
        %v1793 = vmul.f32 %v1741, 1.442695
        %v1794 = vpow.pop %v1793
        %v1795 = vmul.f32 %v1742, 1.442695
        %v1796 = vpow.pop %v1795
        %v1797 = vmul.f32 %v1743, 1.442695
        %v1798 = vpow.pop %v1797
        %v1799 = vmul.f32 %v1744, 1.442695
        %v1800 = vpow.pop %v1799
        %v1801 = vmul.f32 %v1745, 1.442695
        %v1802 = vpow.pop %v1801
        %v1803 = vmul.f32 %v1746, 1.442695
        %v1804 = vpow.pop %v1803
        %v1805 = vmul.f32 %v1747, 1.442695
        %v1806 = vpow.pop %v1805
        %v1807 = vmul.f32 %v1748, 1.442695
        %v1808 = vpow.pop %v1807
        %v1809 = vmul.f32 %v1749, 1.442695
        %v1810 = vpow.pop %v1809
        %v1811 = vmul.f32 %v1750, 1.442695
        %v1812 = vpow.pop %v1811
        %v1813 = vmul.f32 %v1751, 1.442695
        %v1814 = vpow.pop %v1813
        %v1815 = vmul.f32 %v1752, 1.442695
        %v1816 = vpow.pop %v1815
        %v1817 = vsel %vm1624, %v1754, 0.0
        %1818 = vadd.xlane.f32.xlu0 %v1817
        %v1819 = vpop.xlane.xlu0 %1818
        %v1820 = vsel %vm1624, %v1756, 0.0
        %1821 = vadd.xlane.f32.xlu0 %v1820
        %v1822 = vpop.xlane.xlu0 %1821
        %v1823 = vsel %vm1624, %v1758, 0.0
        %1824 = vadd.xlane.f32.xlu0 %v1823
        %v1825 = vpop.xlane.xlu0 %1824
        %v1826 = vsel %vm1624, %v1760, 0.0
        %1827 = vadd.xlane.f32.xlu0 %v1826
        %v1828 = vpop.xlane.xlu0 %1827
        %v1829 = vsel %vm1624, %v1762, 0.0
        %1830 = vadd.xlane.f32.xlu0 %v1829
        %v1831 = vpop.xlane.xlu0 %1830
        %v1832 = vsel %vm1624, %v1764, 0.0
        %1833 = vadd.xlane.f32.xlu0 %v1832
        %v1834 = vpop.xlane.xlu0 %1833
        %v1835 = vsel %vm1624, %v1766, 0.0
        %1836 = vadd.xlane.f32.xlu0 %v1835
        %v1837 = vpop.xlane.xlu0 %1836
        %v1838 = vsel %vm1624, %v1768, 0.0
        %1839 = vadd.xlane.f32.xlu0 %v1838
        %v1840 = vpop.xlane.xlu0 %1839
        %v1841 = vsel %vm1624, %v1770, 0.0
        %1842 = vadd.xlane.f32.xlu0 %v1841
        %v1843 = vpop.xlane.xlu0 %1842
        %v1844 = vsel %vm1624, %v1772, 0.0
        %1845 = vadd.xlane.f32.xlu0 %v1844
        %v1846 = vpop.xlane.xlu0 %1845
        %v1847 = vsel %vm1624, %v1774, 0.0
        %1848 = vadd.xlane.f32.xlu0 %v1847
        %v1849 = vpop.xlane.xlu0 %1848
        %v1850 = vsel %vm1624, %v1776, 0.0
        %1851 = vadd.xlane.f32.xlu0 %v1850
        %v1852 = vpop.xlane.xlu0 %1851
        %v1853 = vsel %vm1624, %v1778, 0.0
        %1854 = vadd.xlane.f32.xlu0 %v1853
        %v1855 = vpop.xlane.xlu0 %1854
        %v1856 = vsel %vm1624, %v1780, 0.0
        %1857 = vadd.xlane.f32.xlu0 %v1856
        %v1858 = vpop.xlane.xlu0 %1857
        %v1859 = vsel %vm1624, %v1782, 0.0
        %1860 = vadd.xlane.f32.xlu0 %v1859
        %v1861 = vpop.xlane.xlu0 %1860
        %v1862 = vsel %vm1624, %v1784, 0.0
        %1863 = vadd.xlane.f32.xlu0 %v1862
        %v1864 = vpop.xlane.xlu0 %1863
        %v1865 = vsel %vm1624, %v1786, 0.0
        %1866 = vadd.xlane.f32.xlu0 %v1865
        %v1867 = vpop.xlane.xlu0 %1866
        %v1868 = vsel %vm1624, %v1788, 0.0
        %1869 = vadd.xlane.f32.xlu0 %v1868
        %v1870 = vpop.xlane.xlu0 %1869
        %v1871 = vsel %vm1624, %v1790, 0.0
        %1872 = vadd.xlane.f32.xlu0 %v1871
        %v1873 = vpop.xlane.xlu0 %1872
        %v1874 = vsel %vm1624, %v1792, 0.0
        %1875 = vadd.xlane.f32.xlu0 %v1874
        %v1876 = vpop.xlane.xlu0 %1875
        %v1877 = vsel %vm1624, %v1794, 0.0
        %1878 = vadd.xlane.f32.xlu0 %v1877
        %v1879 = vpop.xlane.xlu0 %1878
        %v1880 = vsel %vm1624, %v1796, 0.0
        %1881 = vadd.xlane.f32.xlu0 %v1880
        %v1882 = vpop.xlane.xlu0 %1881
        %v1883 = vsel %vm1624, %v1798, 0.0
        %1884 = vadd.xlane.f32.xlu0 %v1883
        %v1885 = vpop.xlane.xlu0 %1884
        %v1886 = vsel %vm1624, %v1800, 0.0
        %1887 = vadd.xlane.f32.xlu0 %v1886
        %v1888 = vpop.xlane.xlu0 %1887
        %v1889 = vsel %vm1624, %v1802, 0.0
        %1890 = vadd.xlane.f32.xlu0 %v1889
        %v1891 = vpop.xlane.xlu0 %1890
        %v1892 = vsel %vm1624, %v1804, 0.0
        %1893 = vadd.xlane.f32.xlu0 %v1892
        %v1894 = vpop.xlane.xlu0 %1893
        %v1895 = vsel %vm1624, %v1806, 0.0
        %1896 = vadd.xlane.f32.xlu0 %v1895
        %v1897 = vpop.xlane.xlu0 %1896
        %v1898 = vsel %vm1624, %v1808, 0.0
        %1899 = vadd.xlane.f32.xlu0 %v1898
        %v1900 = vpop.xlane.xlu0 %1899
        %v1901 = vsel %vm1624, %v1810, 0.0
        %1902 = vadd.xlane.f32.xlu0 %v1901
        %v1903 = vpop.xlane.xlu0 %1902
        %v1904 = vsel %vm1624, %v1812, 0.0
        %1905 = vadd.xlane.f32.xlu0 %v1904
        %v1906 = vpop.xlane.xlu0 %1905
        %v1907 = vsel %vm1624, %v1814, 0.0
        %1908 = vadd.xlane.f32.xlu0 %v1907
        %v1909 = vpop.xlane.xlu0 %1908
        %v1910 = vsel %vm1624, %v1816, 0.0
        %1911 = vadd.xlane.f32.xlu0 %v1910
        %v1912 = vpop.xlane.xlu0 %1911
        %v1913 = vpack.c.bf16 %v1756, %v1754
        %v1914 = vpack.c.bf16 %v1760, %v1758
        %v1915 = vpack.c.bf16 %v1764, %v1762
        %v1916 = vpack.c.bf16 %v1768, %v1766
        %v1917 = vpack.c.bf16 %v1772, %v1770
        %v1918 = vpack.c.bf16 %v1776, %v1774
        %v1919 = vpack.c.bf16 %v1780, %v1778
        %v1920 = vpack.c.bf16 %v1784, %v1782
        %v1921 = vpack.c.bf16 %v1788, %v1786
        %v1922 = vpack.c.bf16 %v1792, %v1790
        %v1923 = vpack.c.bf16 %v1796, %v1794
        %v1924 = vpack.c.bf16 %v1800, %v1798
        %v1925 = vpack.c.bf16 %v1804, %v1802
        %v1926 = vpack.c.bf16 %v1808, %v1806
        %v1927 = vpack.c.bf16 %v1812, %v1810
        %v1928 = vpack.c.bf16 %v1816, %v1814
        %v1930 = vsel %vm1624, %v1913, 0
        %v1933 = vsel %vm1624, %v1914, 0
        %v1936 = vsel %vm1624, %v1915, 0
        %v1939 = vsel %vm1624, %v1916, 0
        %1941 = vmatprep.subr.bf16.mxu0 0
        %1942 = vmatpush1.bf16.msra.mxu0 0
        %1943 = vmatprep.subr.bf16.mxu0 0
        %1944 = vmatpush1.bf16.msra.mxu0 0
        %1945 = vmatprep.subr.bf16.mxu0 0
        %1946 = vmatpush1.bf16.msra.mxu0 0
        %1947 = vmatprep.subr.bf16.mxu0 0
        %1948 = vmatpush1.bf16.msra.mxu0 0
        %1949 = vmatprep.subr.bf16.mxu0 0
        %1950 = vmatpush1.bf16.msra.mxu0 %v1162
        %1951 = vmatprep.subr.bf16.mxu0 0
        %1952 = vmatpush1.bf16.msra.mxu0 %v1161
        %1953 = vmatprep.subr.bf16.mxu0 0
        %1954 = vmatpush1.bf16.msra.mxu0 %v1160
        %1955 = vmatprep.subr.bf16.mxu0 0
        %1956 = vmatpush1.bf16.msra.mxu0 %v1159
        %1957 = vmatprep.subr.bf16.mxu0 0
        %1958 = vmatpush2.bf16.msra.mxu0 0
        %1959 = vmatprep.subr.bf16.mxu0 0
        %1960 = vmatpush2.bf16.msra.mxu0 0
        %1961 = vmatprep.subr.bf16.mxu0 0
        %1962 = vmatpush2.bf16.msra.mxu0 0
        %1963 = vmatprep.subr.bf16.mxu0 0
        %1964 = vmatpush2.bf16.msra.mxu0 0
        %1965 = vmatprep.subr.bf16.mxu0 0
        %1966 = vmatpush2.bf16.msra.mxu0 0
        %1967 = vmatprep.subr.bf16.mxu0 0
        %1968 = vmatpush2.bf16.msra.mxu0 0
        %1969 = vmatprep.subr.bf16.mxu0 0
        %1970 = vmatpush2.bf16.msra.mxu0 0
        %1971 = vmatprep.subr.bf16.mxu0 0
        %1972 = vmatpush2.bf16.msra.mxu0 0
        %1973 = vmatprep.mubr.bf16.mxu0 0
        %1974 = vmatmul.mubr.bf16.gmra.mxu0 %v1930
        %v1975 = vpop.f32.mrf.mxu0
        %v1976 = vadd.f32 0.0, %v1975
        %v1977 = vpop.f32.mrf.mxu0
        %v1978 = vpop.f32.mrf.mxu0
        %v1979 = vadd.f32 0.0, %v1978
        %v1980 = vpop.f32.mrf.mxu0
        %1981 = vmatprep.mubr.bf16.mxu0 0
        %1982 = vmatmul.mubr.bf16.gmra.mxu0 %v1933
        %v1983 = vpop.f32.mrf.mxu0
        %v1984 = vadd.f32 0.0, %v1983
        %v1985 = vpop.f32.mrf.mxu0
        %v1986 = vpop.f32.mrf.mxu0
        %v1987 = vadd.f32 0.0, %v1986
        %v1988 = vpop.f32.mrf.mxu0
        %1989 = vmatprep.mubr.bf16.mxu0 0
        %1990 = vmatmul.mubr.bf16.gmra.mxu0 %v1936
        %v1991 = vpop.f32.mrf.mxu0
        %v1992 = vadd.f32 0.0, %v1991
        %v1993 = vpop.f32.mrf.mxu0
        %v1994 = vpop.f32.mrf.mxu0
        %v1995 = vadd.f32 0.0, %v1994
        %v1996 = vpop.f32.mrf.mxu0
        %1997 = vmatprep.mubr.bf16.mxu0 0
        %1998 = vmatmul.mubr.bf16.gmra.mxu0 %v1939
        %v1999 = vpop.f32.mrf.mxu0
        %v2000 = vadd.f32 0.0, %v1999
        %v2001 = vpop.f32.mrf.mxu0
        %v2002 = vpop.f32.mrf.mxu0
        %v2003 = vadd.f32 0.0, %v2002
        %v2004 = vpop.f32.mrf.mxu0
        %2005 = vdwg.mxu0
        %v2007 = vsel %vm1624, %v1917, 0
        %v2010 = vsel %vm1624, %v1918, 0
        %v2013 = vsel %vm1624, %v1919, 0
        %v2016 = vsel %vm1624, %v1920, 0
        %2018 = vmatprep.subr.bf16.mxu0 0
        %2019 = vmatpush1.bf16.msra.mxu0 0
        %2020 = vmatprep.subr.bf16.mxu0 0
        %2021 = vmatpush1.bf16.msra.mxu0 0
        %2022 = vmatprep.subr.bf16.mxu0 0
        %2023 = vmatpush1.bf16.msra.mxu0 0
        %2024 = vmatprep.subr.bf16.mxu0 0
        %2025 = vmatpush1.bf16.msra.mxu0 0
        %2026 = vmatprep.subr.bf16.mxu0 0
        %2027 = vmatpush1.bf16.msra.mxu0 %v1174
        %2028 = vmatprep.subr.bf16.mxu0 0
        %2029 = vmatpush1.bf16.msra.mxu0 %v1172
        %2030 = vmatprep.subr.bf16.mxu0 0
        %2031 = vmatpush1.bf16.msra.mxu0 %v1170
        %2032 = vmatprep.subr.bf16.mxu0 0
        %2033 = vmatpush1.bf16.msra.mxu0 %v1168
        %2034 = vmatprep.subr.bf16.mxu0 0
        %2035 = vmatpush2.bf16.msra.mxu0 0
        %2036 = vmatprep.subr.bf16.mxu0 0
        %2037 = vmatpush2.bf16.msra.mxu0 0
        %2038 = vmatprep.subr.bf16.mxu0 0
        %2039 = vmatpush2.bf16.msra.mxu0 0
        %2040 = vmatprep.subr.bf16.mxu0 0
        %2041 = vmatpush2.bf16.msra.mxu0 0
        %2042 = vmatprep.subr.bf16.mxu0 0
        %2043 = vmatpush2.bf16.msra.mxu0 0
        %2044 = vmatprep.subr.bf16.mxu0 0
        %2045 = vmatpush2.bf16.msra.mxu0 0
        %2046 = vmatprep.subr.bf16.mxu0 0
        %2047 = vmatpush2.bf16.msra.mxu0 0
        %2048 = vmatprep.subr.bf16.mxu0 0
        %2049 = vmatpush2.bf16.msra.mxu0 0
        %2050 = vmatprep.mubr.bf16.mxu0 0
        %2051 = vmatmul.mubr.bf16.gmra.mxu0 %v2007
        %v2052 = vpop.f32.mrf.mxu0
        %v2053 = vadd.f32 0.0, %v2052
        %v2054 = vpop.f32.mrf.mxu0
        %v2055 = vpop.f32.mrf.mxu0
        %v2056 = vadd.f32 0.0, %v2055
        %v2057 = vpop.f32.mrf.mxu0
        %2058 = vmatprep.mubr.bf16.mxu0 0
        %2059 = vmatmul.mubr.bf16.gmra.mxu0 %v2010
        %v2060 = vpop.f32.mrf.mxu0
        %v2061 = vadd.f32 0.0, %v2060
        %v2062 = vpop.f32.mrf.mxu0
        %v2063 = vpop.f32.mrf.mxu0
        %v2064 = vadd.f32 0.0, %v2063
        %v2065 = vpop.f32.mrf.mxu0
        %2066 = vmatprep.mubr.bf16.mxu0 0
        %2067 = vmatmul.mubr.bf16.gmra.mxu0 %v2013
        %v2068 = vpop.f32.mrf.mxu0
        %v2069 = vadd.f32 0.0, %v2068
        %v2070 = vpop.f32.mrf.mxu0
        %v2071 = vpop.f32.mrf.mxu0
        %v2072 = vadd.f32 0.0, %v2071
        %v2073 = vpop.f32.mrf.mxu0
        %2074 = vmatprep.mubr.bf16.mxu0 0
        %2075 = vmatmul.mubr.bf16.gmra.mxu0 %v2016
        %v2076 = vpop.f32.mrf.mxu0
        %v2077 = vadd.f32 0.0, %v2076
        %v2078 = vpop.f32.mrf.mxu0
        %v2079 = vpop.f32.mrf.mxu0
        %v2080 = vadd.f32 0.0, %v2079
        %v2081 = vpop.f32.mrf.mxu0
        %2082 = vdwg.mxu0
        %v2084 = vsel %vm1624, %v1921, 0
        %v2087 = vsel %vm1624, %v1922, 0
        %v2090 = vsel %vm1624, %v1923, 0
        %v2093 = vsel %vm1624, %v1924, 0
        %2095 = vmatprep.subr.bf16.mxu0 0
        %2096 = vmatpush1.bf16.msra.mxu0 0
        %2097 = vmatprep.subr.bf16.mxu0 0
        %2098 = vmatpush1.bf16.msra.mxu0 0
        %2099 = vmatprep.subr.bf16.mxu0 0
        %2100 = vmatpush1.bf16.msra.mxu0 0
        %2101 = vmatprep.subr.bf16.mxu0 0
        %2102 = vmatpush1.bf16.msra.mxu0 0
        %2103 = vmatprep.subr.bf16.mxu0 0
        %2104 = vmatpush1.bf16.msra.mxu0 %v1186
        %2105 = vmatprep.subr.bf16.mxu0 0
        %2106 = vmatpush1.bf16.msra.mxu0 %v1184
        %2107 = vmatprep.subr.bf16.mxu0 0
        %2108 = vmatpush1.bf16.msra.mxu0 %v1182
        %2109 = vmatprep.subr.bf16.mxu0 0
        %2110 = vmatpush1.bf16.msra.mxu0 %v1180
        %2111 = vmatprep.subr.bf16.mxu0 0
        %2112 = vmatpush2.bf16.msra.mxu0 0
        %2113 = vmatprep.subr.bf16.mxu0 0
        %2114 = vmatpush2.bf16.msra.mxu0 0
        %2115 = vmatprep.subr.bf16.mxu0 0
        %2116 = vmatpush2.bf16.msra.mxu0 0
        %2117 = vmatprep.subr.bf16.mxu0 0
        %2118 = vmatpush2.bf16.msra.mxu0 0
        %2119 = vmatprep.subr.bf16.mxu0 0
        %2120 = vmatpush2.bf16.msra.mxu0 0
        %2121 = vmatprep.subr.bf16.mxu0 0
        %2122 = vmatpush2.bf16.msra.mxu0 0
        %2123 = vmatprep.subr.bf16.mxu0 0
        %2124 = vmatpush2.bf16.msra.mxu0 0
        %2125 = vmatprep.subr.bf16.mxu0 0
        %2126 = vmatpush2.bf16.msra.mxu0 0
        %2127 = vmatprep.mubr.bf16.mxu0 0
        %2128 = vmatmul.mubr.bf16.gmra.mxu0 %v2084
        %v2129 = vpop.f32.mrf.mxu0
        %v2130 = vadd.f32 0.0, %v2129
        %v2131 = vpop.f32.mrf.mxu0
        %v2132 = vpop.f32.mrf.mxu0
        %v2133 = vadd.f32 0.0, %v2132
        %v2134 = vpop.f32.mrf.mxu0
        %2135 = vmatprep.mubr.bf16.mxu0 0
        %2136 = vmatmul.mubr.bf16.gmra.mxu0 %v2087
        %v2137 = vpop.f32.mrf.mxu0
        %v2138 = vadd.f32 0.0, %v2137
        %v2139 = vpop.f32.mrf.mxu0
        %v2140 = vpop.f32.mrf.mxu0
        %v2141 = vadd.f32 0.0, %v2140
        %v2142 = vpop.f32.mrf.mxu0
        %2143 = vmatprep.mubr.bf16.mxu0 0
        %2144 = vmatmul.mubr.bf16.gmra.mxu0 %v2090
        %v2145 = vpop.f32.mrf.mxu0
        %v2146 = vadd.f32 0.0, %v2145
        %v2147 = vpop.f32.mrf.mxu0
        %v2148 = vpop.f32.mrf.mxu0
        %v2149 = vadd.f32 0.0, %v2148
        %v2150 = vpop.f32.mrf.mxu0
        %2151 = vmatprep.mubr.bf16.mxu0 0
        %2152 = vmatmul.mubr.bf16.gmra.mxu0 %v2093
        %v2153 = vpop.f32.mrf.mxu0
        %v2154 = vadd.f32 0.0, %v2153
        %v2155 = vpop.f32.mrf.mxu0
        %v2156 = vpop.f32.mrf.mxu0
        %v2157 = vadd.f32 0.0, %v2156
        %v2158 = vpop.f32.mrf.mxu0
        %2159 = vdwg.mxu0
        %v2161 = vsel %vm1624, %v1925, 0
        %v2164 = vsel %vm1624, %v1926, 0
        %v2167 = vsel %vm1624, %v1927, 0
        %v2170 = vsel %vm1624, %v1928, 0
        %2172 = vmatprep.subr.bf16.mxu0 0
        %2173 = vmatpush1.bf16.msra.mxu0 0
        %2174 = vmatprep.subr.bf16.mxu0 0
        %2175 = vmatpush1.bf16.msra.mxu0 0
        %2176 = vmatprep.subr.bf16.mxu0 0
        %2177 = vmatpush1.bf16.msra.mxu0 0
        %2178 = vmatprep.subr.bf16.mxu0 0
        %2179 = vmatpush1.bf16.msra.mxu0 0
        %2180 = vmatprep.subr.bf16.mxu0 0
        %2181 = vmatpush1.bf16.msra.mxu0 %v1198
        %2182 = vmatprep.subr.bf16.mxu0 0
        %2183 = vmatpush1.bf16.msra.mxu0 %v1196
        %2184 = vmatprep.subr.bf16.mxu0 0
        %2185 = vmatpush1.bf16.msra.mxu0 %v1194
        %2186 = vmatprep.subr.bf16.mxu0 0
        %2187 = vmatpush1.bf16.msra.mxu0 %v1192
        %2188 = vmatprep.subr.bf16.mxu0 0
        %2189 = vmatpush2.bf16.msra.mxu0 0
        %2190 = vmatprep.subr.bf16.mxu0 0
        %2191 = vmatpush2.bf16.msra.mxu0 0
        %2192 = vmatprep.subr.bf16.mxu0 0
        %2193 = vmatpush2.bf16.msra.mxu0 0
        %2194 = vmatprep.subr.bf16.mxu0 0
        %2195 = vmatpush2.bf16.msra.mxu0 0
        %2196 = vmatprep.subr.bf16.mxu0 0
        %2197 = vmatpush2.bf16.msra.mxu0 0
        %2198 = vmatprep.subr.bf16.mxu0 0
        %2199 = vmatpush2.bf16.msra.mxu0 0
        %2200 = vmatprep.subr.bf16.mxu0 0
        %2201 = vmatpush2.bf16.msra.mxu0 0
        %2202 = vmatprep.subr.bf16.mxu0 0
        %2203 = vmatpush2.bf16.msra.mxu0 0
        %2204 = vmatprep.mubr.bf16.mxu0 0
        %2205 = vmatmul.mubr.bf16.gmra.mxu0 %v2161
        %v2206 = vpop.f32.mrf.mxu0
        %v2207 = vadd.f32 0.0, %v2206
        %v2208 = vpop.f32.mrf.mxu0
        %v2209 = vpop.f32.mrf.mxu0
        %v2210 = vadd.f32 0.0, %v2209
        %v2211 = vpop.f32.mrf.mxu0
        %2212 = vmatprep.mubr.bf16.mxu0 0
        %2213 = vmatmul.mubr.bf16.gmra.mxu0 %v2164
        %v2214 = vpop.f32.mrf.mxu0
        %v2215 = vadd.f32 0.0, %v2214
        %v2216 = vpop.f32.mrf.mxu0
        %v2217 = vpop.f32.mrf.mxu0
        %v2218 = vadd.f32 0.0, %v2217
        %v2219 = vpop.f32.mrf.mxu0
        %2220 = vmatprep.mubr.bf16.mxu0 0
        %2221 = vmatmul.mubr.bf16.gmra.mxu0 %v2167
        %v2222 = vpop.f32.mrf.mxu0
        %v2223 = vadd.f32 0.0, %v2222
        %v2224 = vpop.f32.mrf.mxu0
        %v2225 = vpop.f32.mrf.mxu0
        %v2226 = vadd.f32 0.0, %v2225
        %v2227 = vpop.f32.mrf.mxu0
        %2228 = vmatprep.mubr.bf16.mxu0 0
        %2229 = vmatmul.mubr.bf16.gmra.mxu0 %v2170
        %v2230 = vpop.f32.mrf.mxu0
        %v2231 = vadd.f32 0.0, %v2230
        %v2232 = vpop.f32.mrf.mxu0
        %v2233 = vpop.f32.mrf.mxu0
        %v2234 = vadd.f32 0.0, %v2233
        %v2235 = vpop.f32.mrf.mxu0
        %2236 = vdwg.mxu0
        %v2237 = vrcp.pop %v1819
        %v2238 = vrcp.pop %v1822
        %v2239 = vrcp.pop %v1825
        %v2240 = vrcp.pop %v1828
        %v2241 = vrcp.pop %v1831
        %v2242 = vrcp.pop %v1834
        %v2243 = vrcp.pop %v1837
        %v2244 = vrcp.pop %v1840
        %v2245 = vrcp.pop %v1843
        %v2246 = vrcp.pop %v1846
        %v2247 = vrcp.pop %v1849
        %v2248 = vrcp.pop %v1852
        %v2249 = vrcp.pop %v1855
        %v2250 = vrcp.pop %v1858
        %v2251 = vrcp.pop %v1861
        %v2252 = vrcp.pop %v1864
        %v2253 = vrcp.pop %v1867
        %v2254 = vrcp.pop %v1870
        %v2255 = vrcp.pop %v1873
        %v2256 = vrcp.pop %v1876
        %v2257 = vrcp.pop %v1879
        %v2258 = vrcp.pop %v1882
        %v2259 = vrcp.pop %v1885
        %v2260 = vrcp.pop %v1888
        %v2261 = vrcp.pop %v1891
        %v2262 = vrcp.pop %v1894
        %v2263 = vrcp.pop %v1897
        %v2264 = vrcp.pop %v1900
        %v2265 = vrcp.pop %v1903
        %v2266 = vrcp.pop %v1906
        %v2267 = vrcp.pop %v1909
        %v2268 = vrcp.pop %v1912
        %v2269 = vmul.f32 %v1976, %v2237
        %v2270 = vmul.f32 %v1979, %v2238
        %v2271 = vmul.f32 %v1984, %v2239
        %v2272 = vmul.f32 %v1987, %v2240
        %v2273 = vmul.f32 %v1992, %v2241
        %v2274 = vmul.f32 %v1995, %v2242
        %v2275 = vmul.f32 %v2000, %v2243
        %v2276 = vmul.f32 %v2003, %v2244
        %v2277 = vmul.f32 %v2053, %v2245
        %v2278 = vmul.f32 %v2056, %v2246
        %v2279 = vmul.f32 %v2061, %v2247
        %v2280 = vmul.f32 %v2064, %v2248
        %v2281 = vmul.f32 %v2069, %v2249
        %v2282 = vmul.f32 %v2072, %v2250
        %v2283 = vmul.f32 %v2077, %v2251
        %v2284 = vmul.f32 %v2080, %v2252
        %v2285 = vmul.f32 %v2130, %v2253
        %v2286 = vmul.f32 %v2133, %v2254
        %v2287 = vmul.f32 %v2138, %v2255
        %v2288 = vmul.f32 %v2141, %v2256
        %v2289 = vmul.f32 %v2146, %v2257
        %v2290 = vmul.f32 %v2149, %v2258
        %v2291 = vmul.f32 %v2154, %v2259
        %v2292 = vmul.f32 %v2157, %v2260
        %v2293 = vmul.f32 %v2207, %v2261
        %v2294 = vmul.f32 %v2210, %v2262
        %v2295 = vmul.f32 %v2215, %v2263
        %v2296 = vmul.f32 %v2218, %v2264
        %v2297 = vmul.f32 %v2223, %v2265
        %v2298 = vmul.f32 %v2226, %v2266
        %v2299 = vmul.f32 %v2231, %v2267
        %v2300 = vmul.f32 %v2234, %v2268
        %2309 = vrot.lane.b32.xlu0 %v2277, 32
        %v2310 = vpop.permute.xlu0 %2309
        %2311 = vrot.lane.b32.xlu0 %v2278, 32
        %v2312 = vpop.permute.xlu0 %2311
        %2313 = vrot.lane.b32.xlu0 %v2279, 32
        %v2314 = vpop.permute.xlu0 %2313
        %2315 = vrot.lane.b32.xlu0 %v2280, 32
        %v2316 = vpop.permute.xlu0 %2315
        %2317 = vrot.lane.b32.xlu0 %v2281, 32
        %v2318 = vpop.permute.xlu0 %2317
        %2319 = vrot.lane.b32.xlu0 %v2282, 32
        %v2320 = vpop.permute.xlu0 %2319
        %2321 = vrot.lane.b32.xlu0 %v2283, 32
        %v2322 = vpop.permute.xlu0 %2321
        %2323 = vrot.lane.b32.xlu0 %v2284, 32
        %v2324 = vpop.permute.xlu0 %2323
        %2341 = vrot.lane.b32.xlu0 %v2285, 64
        %v2342 = vpop.permute.xlu0 %2341
        %2343 = vrot.lane.b32.xlu0 %v2286, 64
        %v2344 = vpop.permute.xlu0 %2343
        %2345 = vrot.lane.b32.xlu0 %v2287, 64
        %v2346 = vpop.permute.xlu0 %2345
        %2347 = vrot.lane.b32.xlu0 %v2288, 64
        %v2348 = vpop.permute.xlu0 %2347
        %2349 = vrot.lane.b32.xlu0 %v2289, 64
        %v2350 = vpop.permute.xlu0 %2349
        %2351 = vrot.lane.b32.xlu0 %v2290, 64
        %v2352 = vpop.permute.xlu0 %2351
        %2353 = vrot.lane.b32.xlu0 %v2291, 64
        %v2354 = vpop.permute.xlu0 %2353
        %2355 = vrot.lane.b32.xlu0 %v2292, 64
        %v2356 = vpop.permute.xlu0 %2355
        %2373 = vrot.lane.b32.xlu0 %v2293, 96
        %v2374 = vpop.permute.xlu0 %2373
        %2375 = vrot.lane.b32.xlu0 %v2294, 96
        %v2376 = vpop.permute.xlu0 %2375
        %2377 = vrot.lane.b32.xlu0 %v2295, 96
        %v2378 = vpop.permute.xlu0 %2377
        %2379 = vrot.lane.b32.xlu0 %v2296, 96
        %v2380 = vpop.permute.xlu0 %2379
        %2381 = vrot.lane.b32.xlu0 %v2297, 96
        %v2382 = vpop.permute.xlu0 %2381
        %2383 = vrot.lane.b32.xlu0 %v2298, 96
        %v2384 = vpop.permute.xlu0 %2383
        %2385 = vrot.lane.b32.xlu0 %v2299, 96
        %v2386 = vpop.permute.xlu0 %2385
        %2387 = vrot.lane.b32.xlu0 %v2300, 96
        %v2388 = vpop.permute.xlu0 %2387
        %v2397 = vsel %vm1203, %v2269, %v2310
        %v2398 = vsel %vm1203, %v2270, %v2312
        %v2399 = vsel %vm1203, %v2271, %v2314
        %v2400 = vsel %vm1203, %v2272, %v2316
        %v2401 = vsel %vm1203, %v2273, %v2318
        %v2402 = vsel %vm1203, %v2274, %v2320
        %v2403 = vsel %vm1203, %v2275, %v2322
        %v2404 = vsel %vm1203, %v2276, %v2324
        %v2405 = vsel %vm1624, %v2397, %v2342
        %v2406 = vsel %vm1624, %v2398, %v2344
        %v2407 = vsel %vm1624, %v2399, %v2346
        %v2408 = vsel %vm1624, %v2400, %v2348
        %v2409 = vsel %vm1624, %v2401, %v2350
        %v2410 = vsel %vm1624, %v2402, %v2352
        %v2411 = vsel %vm1624, %v2403, %v2354
        %v2412 = vsel %vm1624, %v2404, %v2356
        %vm2413 = vcmask 785408
        %v2414 = vsel %vm2413, %v2405, %v2374
        %v2415 = vsel %vm2413, %v2406, %v2376
        %v2416 = vsel %vm2413, %v2407, %v2378
        %v2417 = vsel %vm2413, %v2408, %v2380
        %v2418 = vsel %vm2413, %v2409, %v2382
        %v2419 = vsel %vm2413, %v2410, %v2384
        %v2420 = vsel %vm2413, %v2411, %v2386
        %v2421 = vsel %vm2413, %v2412, %v2388
        %v2422 = vpack.c.bf16 %v2415, %v2414
        %v2423 = vpack.c.bf16 %v2417, %v2416
        %v2424 = vpack.c.bf16 %v2419, %v2418
        %v2425 = vpack.c.bf16 %v2421, %v2420
        %v2426 = vld [vmem:[#allocation14] sm:$0xf]
        %v2427 = vld [vmem:[#allocation14 + $0x4] sm:$0xf]
        %v2428 = vld [vmem:[#allocation14 + $0x8] sm:$0xf]
        %v2429 = vld [vmem:[#allocation14 + $0xc] sm:$0xf]
        %v2430 = vld [vmem:[#allocation14 + $0x10] sm:$0xf]
        %v2431 = vld [vmem:[#allocation14 + $0x14] sm:$0xf]
        %v2432 = vld [vmem:[#allocation14 + $0x18] sm:$0xf]
        %v2433 = vld [vmem:[#allocation14 + $0x1c] sm:$0xf]
        %v2434 = vld [vmem:[#allocation14 + $0x20] sm:$0xf]
        %v2435 = vld [vmem:[#allocation14 + $0x24] sm:$0xf]
        %v2436 = vld [vmem:[#allocation14 + $0x28] sm:$0xf]
        %v2437 = vld [vmem:[#allocation14 + $0x2c] sm:$0xf]
        %v2438 = vld [vmem:[#allocation14 + $0x30] sm:$0xf]
        %v2439 = vld [vmem:[#allocation14 + $0x34] sm:$0xf]
        %v2440 = vld [vmem:[#allocation14 + $0x38] sm:$0xf]
        %v2441 = vld [vmem:[#allocation14 + $0x3c] sm:$0xf]
        %v2442 = vld [vmem:[%s11] sm:$0x1]
        %v2444 = vlaneseq
        %v2445 = vshrl.u32 %v2444, 7
        %v2446 = vsub.s32 0, %v2445
        %v2447 = vrot.slane %v2442, %v2446
        %v2465 = vunpack.c.l.b16 %v2426
        %v2466 = vunpack.c.l.b16 %v2427
        %v2467 = vunpack.c.l.b16 %v2428
        %v2468 = vunpack.c.l.b16 %v2429
        %v2469 = vunpack.c.l.b16 %v2430
        %v2470 = vunpack.c.l.b16 %v2431
        %v2471 = vunpack.c.l.b16 %v2432
        %v2472 = vunpack.c.l.b16 %v2433
        %v2473 = vunpack.c.l.b16 %v2434
        %v2474 = vunpack.c.l.b16 %v2435
        %v2475 = vunpack.c.l.b16 %v2436
        %v2476 = vunpack.c.l.b16 %v2437
        %v2477 = vunpack.c.l.b16 %v2438
        %v2478 = vunpack.c.l.b16 %v2439
        %v2479 = vunpack.c.l.b16 %v2440
        %v2480 = vunpack.c.l.b16 %v2441
        %v2481 = vpack.c.b16 %v2466, %v2465
        %v2482 = vpack.c.b16 %v2468, %v2467
        %v2483 = vpack.c.b16 %v2470, %v2469
        %v2484 = vpack.c.b16 %v2472, %v2471
        %v2485 = vpack.c.b16 %v2474, %v2473
        %v2486 = vpack.c.b16 %v2476, %v2475
        %v2487 = vpack.c.b16 %v2478, %v2477
        %v2488 = vpack.c.b16 %v2480, %v2479
        %2497 = vmatprep.subr.bf16.mxu0 0
        %2498 = vmatpush1.bf16.msra.mxu0 %v2488
        %2499 = vmatprep.subr.bf16.mxu0 0
        %2500 = vmatpush1.bf16.msra.mxu0 %v2487
        %2501 = vmatprep.subr.bf16.mxu0 0
        %2502 = vmatpush1.bf16.msra.mxu0 %v2486
        %2503 = vmatprep.subr.bf16.mxu0 0
        %2504 = vmatpush1.bf16.msra.mxu0 %v2485
        %2505 = vmatprep.subr.bf16.mxu0 0
        %2506 = vmatpush1.bf16.msra.mxu0 %v2484
        %2507 = vmatprep.subr.bf16.mxu0 0
        %2508 = vmatpush1.bf16.msra.mxu0 %v2483
        %2509 = vmatprep.subr.bf16.mxu0 0
        %2510 = vmatpush1.bf16.msra.mxu0 %v2482
        %2511 = vmatprep.subr.bf16.mxu0 0
        %2512 = vmatpush1.bf16.msra.mxu0 %v2481
        %2513 = vmatprep.subr.bf16.mxu0 0
        %2514 = vmatpush2.bf16.msra.mxu0 0
        %2515 = vmatprep.subr.bf16.mxu0 0
        %2516 = vmatpush2.bf16.msra.mxu0 0
        %2517 = vmatprep.subr.bf16.mxu0 0
        %2518 = vmatpush2.bf16.msra.mxu0 0
        %2519 = vmatprep.subr.bf16.mxu0 0
        %2520 = vmatpush2.bf16.msra.mxu0 0
        %2521 = vmatprep.subr.bf16.mxu0 0
        %2522 = vmatpush2.bf16.msra.mxu0 0
        %2523 = vmatprep.subr.bf16.mxu0 0
        %2524 = vmatpush2.bf16.msra.mxu0 0
        %2525 = vmatprep.subr.bf16.mxu0 0
        %2526 = vmatpush2.bf16.msra.mxu0 0
        %2527 = vmatprep.subr.bf16.mxu0 0
        %2528 = vmatpush2.bf16.msra.mxu0 0
        %2529 = vmatprep.mubr.bf16.mxu0 0
        %2530 = vmatmul.mubr.bf16.gmra.mxu0 %v2422
        %v2531 = vpop.f32.mrf.mxu0
        %v2532 = vadd.f32 %v2447, %v2531
        %v2533 = vpop.f32.mrf.mxu0
        %v2534 = vpop.f32.mrf.mxu0
        %v2535 = vadd.f32 %v2447, %v2534
        %v2536 = vpop.f32.mrf.mxu0
        %2537 = vmatprep.mubr.bf16.mxu0 0
        %2538 = vmatmul.mubr.bf16.gmra.mxu0 %v2423
        %v2539 = vpop.f32.mrf.mxu0
        %v2540 = vadd.f32 %v2447, %v2539
        %v2541 = vpop.f32.mrf.mxu0
        %v2542 = vpop.f32.mrf.mxu0
        %v2543 = vadd.f32 %v2447, %v2542
        %v2544 = vpop.f32.mrf.mxu0
        %2545 = vmatprep.mubr.bf16.mxu0 0
        %2546 = vmatmul.mubr.bf16.gmra.mxu0 %v2424
        %v2547 = vpop.f32.mrf.mxu0
        %v2548 = vadd.f32 %v2447, %v2547
        %v2549 = vpop.f32.mrf.mxu0
        %v2550 = vpop.f32.mrf.mxu0
        %v2551 = vadd.f32 %v2447, %v2550
        %v2552 = vpop.f32.mrf.mxu0
        %2553 = vmatprep.mubr.bf16.mxu0 0
        %2554 = vmatmul.mubr.bf16.gmra.mxu0 %v2425
        %v2555 = vpop.f32.mrf.mxu0
        %v2556 = vadd.f32 %v2447, %v2555
        %v2557 = vpop.f32.mrf.mxu0
        %v2558 = vpop.f32.mrf.mxu0
        %v2559 = vadd.f32 %v2447, %v2558
        %v2560 = vpop.f32.mrf.mxu0
        %2561 = vdwg.mxu0
        %2562 = vst [vmem:[%s581] sm:$0xff] %v2532
        %2563 = vst [vmem:[%s581 + $0x8] sm:$0xff] %v2535
        %2564 = vst [vmem:[%s581 + $0x10] sm:$0xff] %v2540
        %2565 = vst [vmem:[%s581 + $0x18] sm:$0xff] %v2543
        %2566 = vst [vmem:[%s581 + $0x20] sm:$0xff] %v2548
        %2567 = vst [vmem:[%s581 + $0x28] sm:$0xff] %v2551
        %2568 = vst [vmem:[%s581 + $0x30] sm:$0xff] %v2556
        %2569 = vst [vmem:[%s581 + $0x38] sm:$0xff] %v2559
        %s2570 = sand.u32 %s310, 1
        %s2571 = scalar_lea.sflag [#allocation4], %s2570
        %s2572 = sand.u32 %s310, 1
        %s2573 = smul.addr %s2572, 64
        %s2574 = scalar_lea.vmem [#allocation16], %s2573
        // Predicated region
        $region101: #{tpu_custom_call.1} parent=67 // pred_check
          %p2575 = pneg %p320
        $region102: #{tpu_custom_call.1} parent=67 // pred_check_branch
          %2577 = sbr.rel (%p2575) target = $region104
        $region103: #{tpu_custom_call.1} parent=67 // pred_region
          %s2579 = ssub.s32 1024, 1024
          %2580 = vsyncadd %s2571, %s2579
          %s2581 = smul.addr %s35, 8
          %s2582 = smul.addr %s2581, 128
          %s2583 = scalar_lea.hbm %s12, %s2582
          %s2584 = sshll.u32 %s2574, 4
          %s2585 = int_to_ptr.vmem [resolvable:$true] %s2584
          %2590 = dma.vmem_to_hbm [thread:$0]  %s2585, 1024, %s2583, %s2571, 128, 128, 8
        $region104: #{tpu_custom_call.1} parent=67 // pred_fallthru
          _
      $region68: #{tpu_custom_call.1} parent=5 // pred_fallthru
        _
      %p2591 = scmp.le.s32.totalorder 2, %s30
      // Predicated region
      $region105: #{tpu_custom_call.1} parent=5 // pred_check
        %p2592 = pneg %p2591
      $region106: #{tpu_custom_call.1} parent=5 // pred_check_branch
        %2594 = sbr.rel (%p2592) target = $region108
      $region107: #{tpu_custom_call.1} parent=5 // pred_region
        %s2595 = ssub.s32 %s30, 2
        // Predicated region
        $region109: #{tpu_custom_call.1} parent=107 // pred_check
          %p2596 = pneg %p326
        $region110: #{tpu_custom_call.1} parent=107 // pred_check_branch
          %2598 = sbr.rel (%p2596) target = $region112
        $region111: #{tpu_custom_call.1} parent=107 // pred_region
          %s2599 = sand.u32 %s311, 1
          %s2600 = scalar_lea.sflag [#allocation4], %s2599
          %s2601 = sand.u32 %s311, 1
          %s2602 = smul.addr %s2601, 64
          %s2603 = scalar_lea.vmem [#allocation16], %s2602
          %2604 = dma.done %s2600, 1024
        $region112: #{tpu_custom_call.1} parent=107 // pred_fallthru
          _
      $region108: #{tpu_custom_call.1} parent=5 // pred_fallthru
        _
    $region6: #{tpu_custom_call.1} parent=1 // loop_footer
      %s34 = sadd.s32 1, %s30
    $region7: #{tpu_custom_call.1} parent=1 // loop_footer_branch
      %29 = sbr.rel target = $region3
    $region8: #{tpu_custom_call.1} parent=1 // loop_exit
      _
    %2605 = vsyncpa [#allocation3], 1
    %s2606 = scalar_lea.sflag [#allocation3], 1
    %2607 = vsyncpa %s2606, 1
    %2608 = vsyncpa [#allocation6], 1
    %s2609 = scalar_lea.sflag [#allocation6], 1
    %2610 = vsyncpa %s2609, 1
    %2611 = vsyncpa [#allocation9], 1
    %2612 = vsyncpa [#allocation12], 1
    %2613 = vsyncpa [#allocation15], 1
    %2614 = vsyncpa [#allocation4], 1
    %s2615 = scalar_lea.sflag [#allocation4], 1
    %2616 = vsyncpa %s2615, 1

</llo_original>
